<compile_context>
chip_gen: v5e
topology: v5e:2x2
jax: 0.10.0
libtpu: 0.0.40
codegen_flags: <defaults>
</compile_context>

<pallas_src>
import functools

import jax
import jax.numpy as jnp
from jax import lax
from jax.experimental import pallas as pl
from jax.experimental.pallas import tpu as pltpu

EPS = 1e-4  # SPDRectified default epsilon


def _reeig_packed_kernel(mask_ref, up_ref, sp_ref, o_ref, *, n, g, nbt, eps):
    # mask_ref: (GN, GN)      -- constant 0/1 block-diagonal mask, VMEM-resident
    # up_ref  : (NBt, N, GN)  -- NBt slabs, each = G eigenvector matrices packed
    #                            side-by-side along the lane axis
    # sp_ref  : (NBt, 1, GN)  -- matching eigenvalues, packed the same way
    # o_ref   : (NBt, N, GN)  -- packed rectified reconstructions (lane-dense)
    mask = mask_ref[...]                                  # loaded once per step

    def body(t, carry):
        up = up_ref[t]                                    # (N, GN)
        s_rect = jnp.maximum(sp_ref[t], eps)              # (1, GN) -- ReEig clamp
        usp = up * s_rect                                 # scale col k of U_g by s'_g[k]

        # Block-diagonal of the (untransposed) U_g's via one vmul against the
        # resident mask:  tiled[c, r] = U_{r//N}[c%N, r%N]  (sublane-axis concat)
        tiled = jnp.concatenate([up] * g, axis=0) if g > 1 else up  # (GN, GN)
        bd = tiled * mask                                 # block-diag(U_0..U_{G-1})

        # Y_packed[i, g*N + j] = sum_k usp[i, g*N + k] * U_g[j, k]
        #                      = (U_g diag(s'_g) U_g^T)[i, j]
        # Contracting the last axes of both operands: no explicit transpose,
        # MXU consumes the transposed operand directly.
        y = lax.dot_general(
            usp, bd,
            dimension_numbers=(((1,), (1,)), ((), ())),
            precision=lax.Precision.HIGHEST,
            preferred_element_type=jnp.float32)
        o_ref[t] = y.astype(o_ref.dtype)
        return carry

    lax.fori_loop(0, nbt, body, 0, unroll=True)


@jax.jit
def spd_rectified(x):
    """ReEig: eigendecompose each SPD matrix, clamp eigenvalues at EPS, rebuild."""
    B, N, _ = x.shape
    # TODO(synk): symmetric eigendecomposition has no clean Pallas equivalent;
    # it is computed with jnp.linalg.eigh outside the kernel and dominates
    # end-to-end wall time at these sizes (a batched in-kernel Jacobi solver
    # would be the only change that moves total latency materially).
    s, u = jnp.linalg.eigh(x)                             # x = u @ diag(s) @ u.T
    u = u.astype(jnp.float32)
    s = s.astype(jnp.float32)

    # Pack G matrices along the lane axis -> lane-dense (N, G*N) slabs.
    if N <= 128 and 128 % N == 0:
        G = 128 // N
    else:
        G = 1  # TODO(synk): awkward N falls back to sub-128-lane (masked) stores
    # NOTE: zero-padding is applied AFTER eigh on purpose: padded (u=0, s=0)
    # entries reconstruct to exactly 0 (not eps*I) and are sliced away below.
    padB = (-B) % G
    if padB:
        u = jnp.pad(u, ((0, padB), (0, 0), (0, 0)))
        s = jnp.pad(s, ((0, padB), (0, 0)))
    Bp = B + padB
    NB = Bp // G
    GN = G * N

    # up[nb, i, g*N + k] = U_{nb*G+g}[i, k];  sp[nb, 0, g*N + k] = s_{nb*G+g}[k]
    up = u.reshape(NB, G, N, N).transpose(0, 2, 1, 3).reshape(NB, N, GN)
    sp = s.reshape(NB, 1, GN)

    # Block several slabs per grid step to amortize per-step overhead.
    NBt = min(NB, 8)
    padNB = (-NB) % NBt
    if padNB:                                             # padded slabs reconstruct to 0
        up = jnp.pad(up, ((0, padNB), (0, 0), (0, 0)))
        sp = jnp.pad(sp, ((0, padNB), (0, 0), (0, 0)))
    NBp = NB + padNB
    n_steps = NBp // NBt

    # Constant block-diagonal 0/1 mask, DMA'd once and kept VMEM-resident.
    grp = jnp.arange(GN, dtype=jnp.int32) // N
    mask = (grp[:, None] == grp[None, :]).astype(jnp.float32)

    kernel = functools.partial(_reeig_packed_kernel, n=N, g=G, nbt=NBt, eps=EPS)
    flops = 2 * NBp * N * GN * GN
    bytes_accessed = 4 * (NBp * (2 * N * GN + GN) + GN * GN)

    y_packed = pl.pallas_call(
        kernel,
        out_shape=jax.ShapeDtypeStruct((NBp, N, GN), jnp.float32),
        grid_spec=pltpu.PrefetchScalarGridSpec(
            num_scalar_prefetch=0,
            grid=(n_steps,),
            in_specs=[pl.BlockSpec((GN, GN), lambda i: (0, 0)),        # resident mask
                      pl.BlockSpec((NBt, N, GN), lambda i: (i, 0, 0)),
                      pl.BlockSpec((NBt, 1, GN), lambda i: (i, 0, 0))],
            out_specs=pl.BlockSpec((NBt, N, GN), lambda i: (i, 0, 0)),
        ),
        compiler_params=pltpu.CompilerParams(
            dimension_semantics=("parallel",)),           # shards across TCs when n_steps > 1
        cost_estimate=pl.CostEstimate(flops=flops, transcendentals=0,
                                      bytes_accessed=bytes_accessed),
    )(mask, up, sp)

    # Unpack the lane-packed slabs back to (B, N, N) (layout plumbing in XLA).
    y = y_packed[:NB].reshape(NB, N, G, N).transpose(0, 2, 1, 3).reshape(Bp, N, N)
    return y[:B]


def recurrent_layer_forward(x):
    # recurrent_layer.forward: x = self.rect1(x); return x
    # (SPDRectified has no learnable parameters, only the epsilon buffer.)
    return spd_rectified(x)


if __name__ == "__main__":
    key = jax.random.PRNGKey(0)
    B, N = 8, 16
    a = jax.random.normal(key, (B, N, N), dtype=jnp.float32)
    # Deterministic SPD inputs: A A^T + 0.01 I
    x = a @ jnp.swapaxes(a, -1, -2) + 0.01 * jnp.eye(N, dtype=jnp.float32)

    y = recurrent_layer_forward(x)
    jax.block_until_ready(y)

    # Pure-JAX reference for a sanity check.
    s_ref, u_ref = jnp.linalg.eigh(x)
    y_ref = jnp.einsum('bij,bj,bkj->bik', u_ref, jnp.maximum(s_ref, EPS), u_ref)
    err = float(jnp.max(jnp.abs(y - y_ref)))
    assert err < 1e-3, f"max abs error {err}"

    print("KERNEL_OK")
</pallas_src>

<mosaic_0001>
module attributes {stable_mosaic.version = 11 : i64} {
  func.func @_reeig_packed_kernel(%arg0: i32, %arg1: memref<128x128xf32, #tpu.memory_space<vmem>>, %arg2: memref<1x16x128xf32, #tpu.memory_space<vmem>>, %arg3: memref<1x1x128xf32, #tpu.memory_space<vmem>>, %arg4: memref<1x16x128xf32, #tpu.memory_space<vmem>>) attributes {dimension_semantics = [#tpu.dimension_semantics<parallel>], iteration_bounds = array<i64: 1>, scalar_prefetch = 0 : i64, scratch_operands = 0 : i64, tpu.core_type = #tpu.core_type<tc>, window_params = [{pipeline_mode = #tpu.pipeline_mode<synchronous>, transform_indices = @transform_0, window_bounds = array<i64: 128, 128>}, {transform_indices = @transform_1, window_bounds = array<i64: 1, 16, 128>}, {transform_indices = @transform_2, window_bounds = array<i64: 1, 1, 128>}, {transform_indices = @transform_3, window_bounds = array<i64: 1, 16, 128>}]} {
    %c0 = arith.constant 0 : index
    %c0_0 = arith.constant 0 : index
    %0 = vector.load %arg1[%c0, %c0_0] : memref<128x128xf32, #tpu.memory_space<vmem>>, vector<128x128xf32>
    %c0_i32 = arith.constant 0 : i32
    %1 = arith.index_cast %c0_i32 : i32 to index
    %c0_1 = arith.constant 0 : index
    %c0_2 = arith.constant 0 : index
    %2 = vector.load %arg2[%1, %c0_1, %c0_2] : memref<1x16x128xf32, #tpu.memory_space<vmem>>, vector<1x16x128xf32>
    %3 = vector.shape_cast %2 : vector<1x16x128xf32> to vector<16x128xf32>
    %4 = arith.index_cast %c0_i32 : i32 to index
    %c0_3 = arith.constant 0 : index
    %c0_4 = arith.constant 0 : index
    %5 = vector.load %arg3[%4, %c0_3, %c0_4] : memref<1x1x128xf32, #tpu.memory_space<vmem>>, vector<1x1x128xf32>
    %6 = vector.shape_cast %5 : vector<1x1x128xf32> to vector<1x128xf32>
    %cst = arith.constant 9.99999974E-5 : f32
    %7 = vector.broadcast %cst : f32 to vector<1x128xf32>
    %8 = arith.maximumf %6, %7 : vector<1x128xf32>
    %9 = vector.broadcast %8 : vector<1x128xf32> to vector<16x128xf32>
    %10 = arith.mulf %3, %9 : vector<16x128xf32>
    %11 = tpu.concatenate %3, %3, %3, %3, %3, %3, %3, %3 in 0 : vector<16x128xf32>, vector<16x128xf32>, vector<16x128xf32>, vector<16x128xf32>, vector<16x128xf32>, vector<16x128xf32>, vector<16x128xf32>, vector<16x128xf32> -> vector<128x128xf32>
    %12 = arith.mulf %11, %0 : vector<128x128xf32>
    %cst_5 = arith.constant dense<0.000000e+00> : vector<16x128xf32>
    %13 = tpu.matmul %10, %12, %cst_5 {dimension_numbers = #tpu.dot_dimension_numbers<[1], [1], [0], [0], [0, 0, 1, 0], [], []>, precision = #tpu.contract_precision<fp32>} : vector<16x128xf32>, vector<128x128xf32>, vector<16x128xf32> -> vector<16x128xf32>
    %14 = arith.index_cast %c0_i32 : i32 to index
    %c0_6 = arith.constant 0 : index
    %c0_7 = arith.constant 0 : index
    %15 = vector.load %arg4[%14, %c0_6, %c0_7] : memref<1x16x128xf32, #tpu.memory_space<vmem>>, vector<1x16x128xf32>
    %16 = vector.shape_cast %15 : vector<1x16x128xf32> to vector<16x128xf32>
    %17 = vector.shape_cast %13 : vector<16x128xf32> to vector<1x16x128xf32>
    tpu.vector_store %arg4[%14, %c0_6, %c0_7], %17 {strides = array<i32>} : memref<1x16x128xf32, #tpu.memory_space<vmem>>, vector<1x16x128xf32>,
    %c1_i32 = arith.constant 1 : i32
    return
  }
  func.func @transform_0(%arg0: i32) -> (i32, i32) {
    %c0_i32 = arith.constant 0 : i32
    %c0_i32_0 = arith.constant 0 : i32
    %c0_i32_1 = arith.constant 0 : i32
    return %c0_i32, %c0_i32_0 : i32, i32
  }
  func.func @transform_1(%arg0: i32) -> (i32, i32, i32) {
    %c0_i32 = arith.constant 0 : i32
    %c0_i32_0 = arith.constant 0 : i32
    %c0_i32_1 = arith.constant 0 : i32
    return %arg0, %c0_i32, %c0_i32_0 : i32, i32, i32
  }
  func.func @transform_2(%arg0: i32) -> (i32, i32, i32) {
    %c0_i32 = arith.constant 0 : i32
    %c0_i32_0 = arith.constant 0 : i32
    %c0_i32_1 = arith.constant 0 : i32
    return %arg0, %c0_i32, %c0_i32_0 : i32, i32, i32
  }
  func.func @transform_3(%arg0: i32) -> (i32, i32, i32) {
    %c0_i32 = arith.constant 0 : i32
    %c0_i32_0 = arith.constant 0 : i32
    %c0_i32_1 = arith.constant 0 : i32
    return %arg0, %c0_i32, %c0_i32_0 : i32, i32, i32
  }
}

</mosaic_0001>

<llo_original>
// kernel: custom-call.2
$region0: #{custom-call.2}
  %s0 = inlined_call_operand.vmem [shape: f32[8,8,8], index: 0, kind: input, shape index: {}]
  %s1 = inlined_call_operand.vmem [shape: f32[8,8,8], index: 1, kind: input, shape index: {}]
  %s2 = inlined_call_operand.vmem [shape: f32[8,8,8], index: 2, kind: input, shape index: {}]
  %s3 = inlined_call_operand.vmem [shape: f32[8,8,8], index: 3, kind: input, shape index: {}]
  %s4 = inlined_call_operand.vmem [shape: f32[8,8], index: 4, kind: output, shape index: {0}]
  %s5 = inlined_call_operand.vmem [shape: f32[8,8], index: 5, kind: output, shape index: {1}]
  %s6 = inlined_call_operand.vmem [shape: f32[8,8,8], index: 6, kind: output, shape index: {2}]
  %s7 = inlined_call_operand.vmem [shape: f32[8,8,8], index: 7, kind: output, shape index: {3}]
  %s8 = inlined_call_operand.vmem [shape: f32[8,8,8], index: 8, kind: output, shape index: {4}]
  %s9 = inlined_call_operand.vmem [shape: f32[8,8,8], index: 9, kind: output, shape index: {5}]
  %10 = xla_tuple %s4, %s5, %s6, %s7, %s8, %s9
  $region1: #{custom-call.2} parent=0
    #allocation0 [shape = 'u8[8192]{0}', space=vmem, size = 0x2000, scoped, tag = 'operand span for operand 0']
    #allocation1 [shape = 'u8[8192]{0}', space=vmem, size = 0x2000, scoped, tag = 'operand span for operand 1']
    #allocation2 [shape = 'u8[8192]{0}', space=vmem, size = 0x2000, scoped, tag = 'operand span for operand 2']
    #allocation3 [shape = 'u8[8192]{0}', space=vmem, size = 0x2000, scoped, tag = 'operand span for operand 3']
    #allocation4 [shape = 'u8[8192]{0}', space=vmem, size = 0x2000, scoped, tag = 'operand span for operand 4']
    #allocation5 [shape = 'u8[8192]{0}', space=vmem, size = 0x2000, scoped, tag = 'operand span for operand 5']
    #allocation6 [shape = 'u8[8192]{0}', space=vmem, size = 0x2000, scoped, tag = 'operand span for operand 6']
    #allocation7 [shape = 'u8[8192]{0}', space=vmem, size = 0x2000, scoped, tag = 'operand span for operand 7']
    #allocation8 [shape = 'u8[8192]{0}', space=vmem, size = 0x2000, scoped, tag = 'operand span for operand 8']
    #allocation9 [shape = 'u8[8192]{0}', space=vmem, size = 0x2000, scoped, tag = 'operand span for operand 9']
    loop: start=0, step=1, limit=10
    $region2: #{custom-call.2} parent=1 // loop_pre_header
      _
    $region3: #{custom-call.2} parent=1 // loop_header
      %s12 = sphi 0, %s16
      %p13 = scmp.ge.s32.totalorder %s12, 10
      %s24 = sphi 0, %s26
      %s27 = sphi 0, %s24
      %s28 = sphi 0, %s27
      %s44 = sphi 0, %s28
      %s52 = sphi 0, %s54
      %s55 = sphi 0, %s52
      %s56 = sphi 0, %s55
      %s72 = sphi 0, %s56
    $region4: #{custom-call.2} parent=1 // loop_header_branch
      %15 = sbr.rel (%p13) target = $region8
    $region5: #{custom-call.2} parent=1 // loop_body
      %s17 = ssub.s32 %s12, 1
      %s18 = ssub.s32 %s12, 2
      %s19 = sadd.s32 %s12, 1
      %s20 = sshrl.u32 %s12, 3
      %s21 = sshrl.u32 %s19, 3
      %s22 = ssub.s32 %s20, %s21
      %p23 = scmp.eq.s32.totalorder %s22, 0
      %s25 = sadd.s32 %s24, 1
      %s26 = scalar_select %p23, %s24, %s25
      %p29 = pneg %p23
      %p30 = scmp.eq.s32.totalorder %s12, 7
      %p31 = por %p29, %p30
      %p32 = scmp.ne.s32.totalorder %s24, %s27
      %p33 = scmp.eq.s32.totalorder %s12, 0
      %p34 = por %p32, %p33
      %p35 = scmp.ne.s32.totalorder %s24, %s27
      %p36 = scmp.eq.s32.totalorder %s17, 7
      %p37 = por %p35, %p36
      %p38 = scmp.ne.s32.totalorder %s27, %s28
      %p39 = scmp.eq.s32.totalorder %s17, 0
      %p40 = por %p38, %p39
      %p41 = scmp.ne.s32.totalorder %s27, %s28
      %p42 = scmp.eq.s32.totalorder %s18, 7
      %p43 = por %p41, %p42
      %p45 = scmp.ne.s32.totalorder %s28, %s44
      %p46 = scmp.eq.s32.totalorder %s18, 0
      %p47 = por %p45, %p46
      %s48 = sshrl.u32 %s12, 3
      %s49 = sshrl.u32 %s19, 3
      %s50 = ssub.s32 %s48, %s49
      %p51 = scmp.eq.s32.totalorder %s50, 0
      %s53 = sadd.s32 %s52, 1
      %s54 = scalar_select %p51, %s52, %s53
      %p57 = pneg %p51
      %p58 = scmp.eq.s32.totalorder %s12, 7
      %p59 = por %p57, %p58
      %p60 = scmp.ne.s32.totalorder %s52, %s55
      %p61 = scmp.eq.s32.totalorder %s12, 0
      %p62 = por %p60, %p61
      %p63 = scmp.ne.s32.totalorder %s52, %s55
      %p64 = scmp.eq.s32.totalorder %s17, 7
      %p65 = por %p63, %p64
      %p66 = scmp.ne.s32.totalorder %s55, %s56
      %p67 = scmp.eq.s32.totalorder %s17, 0
      %p68 = por %p66, %p67
      %p69 = scmp.ne.s32.totalorder %s55, %s56
      %p70 = scmp.eq.s32.totalorder %s18, 7
      %p71 = por %p69, %p70
      %p73 = scmp.ne.s32.totalorder %s56, %s72
      %p74 = scmp.eq.s32.totalorder %s18, 0
      %p75 = por %p73, %p74
      %p76 = scmp.le.s32.totalorder 1, %s12
      %p77 = scmp.lt.s32.totalorder %s12, 9
      %p78 = pnand %p76, %p77
      %p79 = pneg %p78
      // Predicated region
      $region9: #{custom-call.2} parent=5 // pred_check
        _
      $region10: #{custom-call.2} parent=5 // pred_check_branch
        %81 = sbr.rel (%p78) target = $region12
      $region11: #{custom-call.2} parent=5 // pred_region
        %s82 = ssub.s32 %s12, 1
      $region12: #{custom-call.2} parent=5 // pred_fallthru
        _
      %p83 = scmp.lt.s32.totalorder %s12, 8
      // Predicated region
      $region13: #{custom-call.2} parent=5 // pred_check
        %p84 = pneg %p83
      $region14: #{custom-call.2} parent=5 // pred_check_branch
        %86 = sbr.rel (%p84) target = $region16
      $region15: #{custom-call.2} parent=5 // pred_region
        %s87 = sand.u32 %s12, 1
        %s88 = sand.u32 %s12, 1
        %s89 = smul.addr %s88, 8
        %s90 = scalar_lea.vmem [#allocation0], %s89
        %s91 = smul.addr %s12, 8
        %s92 = scalar_lea.vmem %s0, %s91
        // Predicated region
        $region17: #{custom-call.2} parent=15 // pred_check
          _
        $region18: #{custom-call.2} parent=15 // pred_check_branch
          %94 = sbr.rel (0) target = $region20
        $region19: #{custom-call.2} parent=15 // pred_region
          // Predicated region
          $region21: #{custom-call.2} parent=19 // pred_check
            _
          $region22: #{custom-call.2} parent=19 // pred_check_branch
            %96 = sbr.rel (0) target = $region24
          $region23: #{custom-call.2} parent=19 // pred_region
            // Predicated region
            $region36: #{custom-call.2} parent=23 // pred_check
              _
            $region37: #{custom-call.2} parent=23 // pred_check_branch
              %112 = sbr.rel (0) target = $region39
            $region38: #{custom-call.2} parent=23 // pred_region
              loop: start=0, step=1, limit=1
              $region40: #{custom-call.2} parent=38 // loop_pre_header
                _
              $region41: #{custom-call.2} parent=38 // loop_header
                %s114 = sphi 0, %s118
                %p115 = scmp.ge.s32.totalorder %s114, 1
                %s119 = sphi %s92, %s92
                %s120 = sphi %s90, %s90
              $region42: #{custom-call.2} parent=38 // loop_header_branch
                %117 = sbr.rel (%p115) target = $region46
              $region43: #{custom-call.2} parent=38 // loop_body
                %v121 = vld [vmem:[%s119] sm:$0xff]
                %122 = vst [vmem:[%s120] sm:$0xff] %v121
              $region44: #{custom-call.2} parent=38 // loop_footer
                %s118 = sadd.s32 1, %s114
              $region45: #{custom-call.2} parent=38 // loop_footer_branch
                %113 = sbr.rel target = $region41
              $region46: #{custom-call.2} parent=38 // loop_exit
                _
            $region39: #{custom-call.2} parent=23 // pred_fallthru
              _
            // Predicated region
            $region47: #{custom-call.2} parent=23 // pred_check
              _
            $region48: #{custom-call.2} parent=23 // pred_check_branch
              %124 = sbr.rel target = $region50
            $region49: #{custom-call.2} parent=23 // pred_region
              _
            $region50: #{custom-call.2} parent=23 // pred_fallthru
              _
          $region24: #{custom-call.2} parent=19 // pred_fallthru
            _
          // Predicated region
          $region25: #{custom-call.2} parent=19 // pred_check
            _
          $region26: #{custom-call.2} parent=19 // pred_check_branch
            %98 = sbr.rel target = $region28
          $region27: #{custom-call.2} parent=19 // pred_region
            %s100 = ssub.s32 256, 1
            loop: start=0, step=1, limit=1
            $region29: #{custom-call.2} parent=27 // loop_pre_header
              _
            $region30: #{custom-call.2} parent=27 // loop_header
              %s102 = sphi 0, %s106
              %p103 = scmp.ge.s32.totalorder %s102, 1
              %s107 = sphi %s92, %s92
              %s108 = sphi %s90, %s90
            $region31: #{custom-call.2} parent=27 // loop_header_branch
              %105 = sbr.rel (%p103) target = $region35
            $region32: #{custom-call.2} parent=27 // loop_body
              %v109 = vld [vmem:[%s107] sm:%s100]
              %110 = vst [vmem:[%s108] sm:%s100] %v109
            $region33: #{custom-call.2} parent=27 // loop_footer
              %s106 = sadd.s32 1, %s102
            $region34: #{custom-call.2} parent=27 // loop_footer_branch
              %101 = sbr.rel target = $region30
            $region35: #{custom-call.2} parent=27 // loop_exit
              _
          $region28: #{custom-call.2} parent=19 // pred_fallthru
            _
        $region20: #{custom-call.2} parent=15 // pred_fallthru
          _
        %125 = vnop
        %s126 = sand.u32 %s12, 1
        %s127 = sand.u32 %s12, 1
        %s128 = smul.addr %s127, 8
        %s129 = scalar_lea.vmem [#allocation1], %s128
        %s130 = smul.addr %s12, 8
        %s131 = scalar_lea.vmem %s1, %s130
        // Predicated region
        $region51: #{custom-call.2} parent=15 // pred_check
          _
        $region52: #{custom-call.2} parent=15 // pred_check_branch
          %133 = sbr.rel (0) target = $region54
        $region53: #{custom-call.2} parent=15 // pred_region
          // Predicated region
          $region55: #{custom-call.2} parent=53 // pred_check
            _
          $region56: #{custom-call.2} parent=53 // pred_check_branch
            %135 = sbr.rel (0) target = $region58
          $region57: #{custom-call.2} parent=53 // pred_region
            // Predicated region
            $region70: #{custom-call.2} parent=57 // pred_check
              _
            $region71: #{custom-call.2} parent=57 // pred_check_branch
              %151 = sbr.rel (0) target = $region73
            $region72: #{custom-call.2} parent=57 // pred_region
              loop: start=0, step=1, limit=1
              $region74: #{custom-call.2} parent=72 // loop_pre_header
                _
              $region75: #{custom-call.2} parent=72 // loop_header
                %s153 = sphi 0, %s157
                %p154 = scmp.ge.s32.totalorder %s153, 1
                %s158 = sphi %s131, %s131
                %s159 = sphi %s129, %s129
              $region76: #{custom-call.2} parent=72 // loop_header_branch
                %156 = sbr.rel (%p154) target = $region80
              $region77: #{custom-call.2} parent=72 // loop_body
                %v160 = vld [vmem:[%s158] sm:$0xff]
                %161 = vst [vmem:[%s159] sm:$0xff] %v160
              $region78: #{custom-call.2} parent=72 // loop_footer
                %s157 = sadd.s32 1, %s153
              $region79: #{custom-call.2} parent=72 // loop_footer_branch
                %152 = sbr.rel target = $region75
              $region80: #{custom-call.2} parent=72 // loop_exit
                _
            $region73: #{custom-call.2} parent=57 // pred_fallthru
              _
            // Predicated region
            $region81: #{custom-call.2} parent=57 // pred_check
              _
            $region82: #{custom-call.2} parent=57 // pred_check_branch
              %163 = sbr.rel target = $region84
            $region83: #{custom-call.2} parent=57 // pred_region
              _
            $region84: #{custom-call.2} parent=57 // pred_fallthru
              _
          $region58: #{custom-call.2} parent=53 // pred_fallthru
            _
          // Predicated region
          $region59: #{custom-call.2} parent=53 // pred_check
            _
          $region60: #{custom-call.2} parent=53 // pred_check_branch
            %137 = sbr.rel target = $region62
          $region61: #{custom-call.2} parent=53 // pred_region
            %s139 = ssub.s32 256, 1
            loop: start=0, step=1, limit=1
            $region63: #{custom-call.2} parent=61 // loop_pre_header
              _
            $region64: #{custom-call.2} parent=61 // loop_header
              %s141 = sphi 0, %s145
              %p142 = scmp.ge.s32.totalorder %s141, 1
              %s146 = sphi %s131, %s131
              %s147 = sphi %s129, %s129
            $region65: #{custom-call.2} parent=61 // loop_header_branch
              %144 = sbr.rel (%p142) target = $region69
            $region66: #{custom-call.2} parent=61 // loop_body
              %v148 = vld [vmem:[%s146] sm:%s139]
              %149 = vst [vmem:[%s147] sm:%s139] %v148
            $region67: #{custom-call.2} parent=61 // loop_footer
              %s145 = sadd.s32 1, %s141
            $region68: #{custom-call.2} parent=61 // loop_footer_branch
              %140 = sbr.rel target = $region64
            $region69: #{custom-call.2} parent=61 // loop_exit
              _
          $region62: #{custom-call.2} parent=53 // pred_fallthru
            _
        $region54: #{custom-call.2} parent=15 // pred_fallthru
          _
        %164 = vnop
        %s165 = sand.u32 %s12, 1
        %s166 = sand.u32 %s12, 1
        %s167 = smul.addr %s166, 8
        %s168 = scalar_lea.vmem [#allocation2], %s167
        %s169 = smul.addr %s12, 8
        %s170 = scalar_lea.vmem %s2, %s169
        // Predicated region
        $region85: #{custom-call.2} parent=15 // pred_check
          _
        $region86: #{custom-call.2} parent=15 // pred_check_branch
          %172 = sbr.rel (0) target = $region88
        $region87: #{custom-call.2} parent=15 // pred_region
          // Predicated region
          $region89: #{custom-call.2} parent=87 // pred_check
            _
          $region90: #{custom-call.2} parent=87 // pred_check_branch
            %174 = sbr.rel (0) target = $region92
          $region91: #{custom-call.2} parent=87 // pred_region
            // Predicated region
            $region104: #{custom-call.2} parent=91 // pred_check
              _
            $region105: #{custom-call.2} parent=91 // pred_check_branch
              %190 = sbr.rel (0) target = $region107
            $region106: #{custom-call.2} parent=91 // pred_region
              loop: start=0, step=1, limit=1
              $region108: #{custom-call.2} parent=106 // loop_pre_header
                _
              $region109: #{custom-call.2} parent=106 // loop_header
                %s192 = sphi 0, %s196
                %p193 = scmp.ge.s32.totalorder %s192, 1
                %s197 = sphi %s170, %s170
                %s198 = sphi %s168, %s168
              $region110: #{custom-call.2} parent=106 // loop_header_branch
                %195 = sbr.rel (%p193) target = $region114
              $region111: #{custom-call.2} parent=106 // loop_body
                %v199 = vld [vmem:[%s197] sm:$0xff]
                %200 = vst [vmem:[%s198] sm:$0xff] %v199
              $region112: #{custom-call.2} parent=106 // loop_footer
                %s196 = sadd.s32 1, %s192
              $region113: #{custom-call.2} parent=106 // loop_footer_branch
                %191 = sbr.rel target = $region109
              $region114: #{custom-call.2} parent=106 // loop_exit
                _
            $region107: #{custom-call.2} parent=91 // pred_fallthru
              _
            // Predicated region
            $region115: #{custom-call.2} parent=91 // pred_check
              _
            $region116: #{custom-call.2} parent=91 // pred_check_branch
              %202 = sbr.rel target = $region118
            $region117: #{custom-call.2} parent=91 // pred_region
              _
            $region118: #{custom-call.2} parent=91 // pred_fallthru
              _
          $region92: #{custom-call.2} parent=87 // pred_fallthru
            _
          // Predicated region
          $region93: #{custom-call.2} parent=87 // pred_check
            _
          $region94: #{custom-call.2} parent=87 // pred_check_branch
            %176 = sbr.rel target = $region96
          $region95: #{custom-call.2} parent=87 // pred_region
            %s178 = ssub.s32 256, 1
            loop: start=0, step=1, limit=1
            $region97: #{custom-call.2} parent=95 // loop_pre_header
              _
            $region98: #{custom-call.2} parent=95 // loop_header
              %s180 = sphi 0, %s184
              %p181 = scmp.ge.s32.totalorder %s180, 1
              %s185 = sphi %s170, %s170
              %s186 = sphi %s168, %s168
            $region99: #{custom-call.2} parent=95 // loop_header_branch
              %183 = sbr.rel (%p181) target = $region103
            $region100: #{custom-call.2} parent=95 // loop_body
              %v187 = vld [vmem:[%s185] sm:%s178]
              %188 = vst [vmem:[%s186] sm:%s178] %v187
            $region101: #{custom-call.2} parent=95 // loop_footer
              %s184 = sadd.s32 1, %s180
            $region102: #{custom-call.2} parent=95 // loop_footer_branch
              %179 = sbr.rel target = $region98
            $region103: #{custom-call.2} parent=95 // loop_exit
              _
          $region96: #{custom-call.2} parent=87 // pred_fallthru
            _
        $region88: #{custom-call.2} parent=15 // pred_fallthru
          _
        %203 = vnop
        %s204 = sand.u32 %s12, 1
        %s205 = sand.u32 %s12, 1
        %s206 = smul.addr %s205, 8
        %s207 = scalar_lea.vmem [#allocation3], %s206
        %s208 = smul.addr %s12, 8
        %s209 = scalar_lea.vmem %s3, %s208
        // Predicated region
        $region119: #{custom-call.2} parent=15 // pred_check
          _
        $region120: #{custom-call.2} parent=15 // pred_check_branch
          %211 = sbr.rel (0) target = $region122
        $region121: #{custom-call.2} parent=15 // pred_region
          // Predicated region
          $region123: #{custom-call.2} parent=121 // pred_check
            _
          $region124: #{custom-call.2} parent=121 // pred_check_branch
            %213 = sbr.rel (0) target = $region126
          $region125: #{custom-call.2} parent=121 // pred_region
            // Predicated region
            $region138: #{custom-call.2} parent=125 // pred_check
              _
            $region139: #{custom-call.2} parent=125 // pred_check_branch
              %229 = sbr.rel (0) target = $region141
            $region140: #{custom-call.2} parent=125 // pred_region
              loop: start=0, step=1, limit=1
              $region142: #{custom-call.2} parent=140 // loop_pre_header
                _
              $region143: #{custom-call.2} parent=140 // loop_header
                %s231 = sphi 0, %s235
                %p232 = scmp.ge.s32.totalorder %s231, 1
                %s236 = sphi %s209, %s209
                %s237 = sphi %s207, %s207
              $region144: #{custom-call.2} parent=140 // loop_header_branch
                %234 = sbr.rel (%p232) target = $region148
              $region145: #{custom-call.2} parent=140 // loop_body
                %v238 = vld [vmem:[%s236] sm:$0xff]
                %239 = vst [vmem:[%s237] sm:$0xff] %v238
              $region146: #{custom-call.2} parent=140 // loop_footer
                %s235 = sadd.s32 1, %s231
              $region147: #{custom-call.2} parent=140 // loop_footer_branch
                %230 = sbr.rel target = $region143
              $region148: #{custom-call.2} parent=140 // loop_exit
                _
            $region141: #{custom-call.2} parent=125 // pred_fallthru
              _
            // Predicated region
            $region149: #{custom-call.2} parent=125 // pred_check
              _
            $region150: #{custom-call.2} parent=125 // pred_check_branch
              %241 = sbr.rel target = $region152
            $region151: #{custom-call.2} parent=125 // pred_region
              _
            $region152: #{custom-call.2} parent=125 // pred_fallthru
              _
          $region126: #{custom-call.2} parent=121 // pred_fallthru
            _
          // Predicated region
          $region127: #{custom-call.2} parent=121 // pred_check
            _
          $region128: #{custom-call.2} parent=121 // pred_check_branch
            %215 = sbr.rel target = $region130
          $region129: #{custom-call.2} parent=121 // pred_region
            %s217 = ssub.s32 256, 1
            loop: start=0, step=1, limit=1
            $region131: #{custom-call.2} parent=129 // loop_pre_header
              _
            $region132: #{custom-call.2} parent=129 // loop_header
              %s219 = sphi 0, %s223
              %p220 = scmp.ge.s32.totalorder %s219, 1
              %s224 = sphi %s209, %s209
              %s225 = sphi %s207, %s207
            $region133: #{custom-call.2} parent=129 // loop_header_branch
              %222 = sbr.rel (%p220) target = $region137
            $region134: #{custom-call.2} parent=129 // loop_body
              %v226 = vld [vmem:[%s224] sm:%s217]
              %227 = vst [vmem:[%s225] sm:%s217] %v226
            $region135: #{custom-call.2} parent=129 // loop_footer
              %s223 = sadd.s32 1, %s219
            $region136: #{custom-call.2} parent=129 // loop_footer_branch
              %218 = sbr.rel target = $region132
            $region137: #{custom-call.2} parent=129 // loop_exit
              _
          $region130: #{custom-call.2} parent=121 // pred_fallthru
            _
        $region122: #{custom-call.2} parent=15 // pred_fallthru
          _
        %242 = vnop
      $region16: #{custom-call.2} parent=5 // pred_fallthru
        _
      %p243 = scmp.le.s32.totalorder 1, %s12
      %p244 = scmp.lt.s32.totalorder %s12, 9
      %p245 = pnand %p243, %p244
      %p246 = pneg %p245
      // Predicated region
      $region153: #{custom-call.2} parent=5 // pred_check
        _
      $region154: #{custom-call.2} parent=5 // pred_check_branch
        %248 = sbr.rel (%p245) target = $region156
      $region155: #{custom-call.2} parent=5 // pred_region
        #allocation10 [shape = 'f32[8,8]{1,0}', space=vmem, size = 0x1000, scoped, tag = 'a top-left matrix']
        #allocation11 [shape = 'f32[8,8]{1,0}', space=vmem, size = 0x1000, scoped, tag = 'a top-right matrix']
        #allocation12 [shape = 'f32[8,8]{1,0}', space=vmem, size = 0x1000, scoped, tag = 'a bottom-left matrix']
        #allocation13 [shape = 'f32[8,8]{1,0}', space=vmem, size = 0x1000, scoped, tag = 'a bottom-right matrix']
        %s249 = ssub.s32 %s12, 1
        %s250 = sand.u32 %s17, 1
        %s251 = sand.u32 %s17, 1
        %s252 = smul.addr %s251, 8
        %s253 = scalar_lea.vmem [#allocation0], %s252
        %s254 = sand.u32 %s17, 1
        %s255 = sand.u32 %s17, 1
        %s256 = smul.addr %s255, 8
        %s257 = scalar_lea.vmem [#allocation1], %s256
        %s258 = sand.u32 %s17, 1
        %s259 = sand.u32 %s17, 1
        %s260 = smul.addr %s259, 8
        %s261 = scalar_lea.vmem [#allocation2], %s260
        %s262 = sand.u32 %s17, 1
        %s263 = sand.u32 %s17, 1
        %s264 = smul.addr %s263, 8
        %s265 = scalar_lea.vmem [#allocation3], %s264
        %s266 = sand.u32 %s17, 1
        %s267 = sand.u32 %s17, 1
        %s268 = smul.addr %s267, 8
        %s269 = scalar_lea.vmem [#allocation0], %s268
        %s270 = sand.u32 %s17, 1
        %s271 = sand.u32 %s17, 1
        %s272 = smul.addr %s271, 8
        %s273 = scalar_lea.vmem [#allocation1], %s272
        %s274 = sand.u32 %s17, 1
        %s275 = sand.u32 %s17, 1
        %s276 = smul.addr %s275, 8
        %s277 = scalar_lea.vmem [#allocation2], %s276
        %s278 = sand.u32 %s17, 1
        %s279 = sand.u32 %s17, 1
        %s280 = smul.addr %s279, 8
        %s281 = scalar_lea.vmem [#allocation3], %s280
        %p282 = pneg %p40
        %p283 = pneg %p37
        %s284 = sand.u32 %s27, 1
        %s285 = sand.u32 %s27, 1
        %s286 = smul.addr %s285, 8
        %s287 = scalar_lea.vmem [#allocation4], %s286
        %p288 = pneg %p68
        %p289 = pneg %p65
        %s290 = sand.u32 %s55, 1
        %s291 = sand.u32 %s55, 1
        %s292 = smul.addr %s291, 8
        %s293 = scalar_lea.vmem [#allocation5], %s292
        %s294 = sand.u32 %s17, 1
        %s295 = sand.u32 %s17, 1
        %s296 = smul.addr %s295, 8
        %s297 = scalar_lea.vmem [#allocation6], %s296
        %s298 = sand.u32 %s17, 1
        %s299 = sand.u32 %s17, 1
        %s300 = smul.addr %s299, 8
        %s301 = scalar_lea.vmem [#allocation7], %s300
        %s302 = sand.u32 %s17, 1
        %s303 = sand.u32 %s17, 1
        %s304 = smul.addr %s303, 8
        %s305 = scalar_lea.vmem [#allocation8], %s304
        %s306 = sand.u32 %s17, 1
        %s307 = sand.u32 %s17, 1
        %s308 = smul.addr %s307, 8
        %s309 = scalar_lea.vmem [#allocation9], %s308
        %s310 = sshrl.u32 %s17, 3
        %s311 = sshrl.u32 %s17, 3
        %s312 = smov [#allocation10]
        %v313 = vld [vmem:[%s253] sm:$0xff]
        %314 = vst [vmem:[%s312] sm:$0xff] %v313
        %s315 = smov [#allocation11]
        %v316 = vld [vmem:[%s257] sm:$0xff]
        %317 = vst [vmem:[%s315] sm:$0xff] %v316
        %s318 = smov [#allocation12]
        %v319 = vld [vmem:[%s261] sm:$0xff]
        %320 = vst [vmem:[%s318] sm:$0xff] %v319
        %s321 = smov [#allocation13]
        %v322 = vld [vmem:[%s265] sm:$0xff]
        %323 = vst [vmem:[%s321] sm:$0xff] %v322
        %324 = vst [vmem:[%s297] sm:$0xff] 0.0
        %325 = vst [vmem:[%s301] sm:$0xff] 0.0
        %326 = vst [vmem:[%s305] sm:$0xff] 0.0
        %327 = vst [vmem:[%s309] sm:$0xff] 0.0
        %s328 = smov %s297
        %v329 = vlaneseq
        %v330 = vand.u32 %v329, 127
        %v331 = vmov %v330
        %v332 = vlaneseq
        %v333 = vshrl.u32 %v332, 7
        %v334 = vmov %v333
        %v335 = vld [vmem:[%s328] sm:$0xff]
        %vm338 = vcmp.eq.s32.totalorder %v334, %v331
        %v339 = vsel %vm338, 1.0, %v335
        %340 = vst [vmem:[%s328] sm:$0xff] %v339
        %s341 = smov %s309
        %v342 = vlaneseq
        %v343 = vand.u32 %v342, 127
        %v344 = vmov %v343
        %v345 = vlaneseq
        %v346 = vshrl.u32 %v345, 7
        %v347 = vmov %v346
        %v348 = vld [vmem:[%s341] sm:$0xff]
        %vm351 = vcmp.eq.s32.totalorder %v347, %v344
        %v352 = vsel %vm351, 1.0, %v348
        %353 = vst [vmem:[%s341] sm:$0xff] %v352
        // While loop
        $region157: #{custom-call.2} parent=155 // loop_pre_header
          _
        $region158: #{custom-call.2} parent=155 // loop_header
          %s355 = sphi 0, %s937
          %v356 = vlaneseq
          %v357 = vand.u32 %v356, 127
          %v358 = vmov %v357
          %v359 = vlaneseq
          %v360 = vshrl.u32 %v359, 7
          %v361 = vmov %v360
          %s362 = smov [#allocation10]
          %v363 = vlaneseq
          %v364 = vand.u32 %v363, 127
          %vm365 = vcmp.ge.s32.totalorder %v364, 0
          %vm366 = vcmp.lt.s32.totalorder %v364, 8
          %vm367 = vmand %vm365, %vm366
          %v368 = vld [vmem:[%s362] sm:$0xff]
          %v369 = vsel %vm367, %v368, 0.0
          %v370 = vmul.f32 %v369, %v369
          %vm373 = vcmp.eq.s32.totalorder %v361, %v358
          %v374 = vsel %vm373, 0.0, %v370
          %v375 = vlaneseq
          %v376 = vand.u32 %v375, 127
          %v377 = vmov %v376
          %v378 = vlaneseq
          %v379 = vshrl.u32 %v378, 7
          %v380 = vmov %v379
          %s381 = smov [#allocation11]
          %v382 = vlaneseq
          %v383 = vand.u32 %v382, 127
          %vm384 = vcmp.ge.s32.totalorder %v383, 0
          %vm385 = vcmp.lt.s32.totalorder %v383, 8
          %vm386 = vmand %vm384, %vm385
          %v387 = vld [vmem:[%s381] sm:$0xff]
          %v388 = vsel %vm386, %v387, 0.0
          %v389 = vmul.f32 %v388, %v388
          %v390 = vadd.f32 %v374, %v389
          %v391 = vadd.f32 %v370, %v389
          %v392 = vlaneseq
          %v393 = vand.u32 %v392, 127
          %v394 = vmov %v393
          %v395 = vlaneseq
          %v396 = vshrl.u32 %v395, 7
          %v397 = vmov %v396
          %s398 = smov [#allocation12]
          %v399 = vlaneseq
          %v400 = vand.u32 %v399, 127
          %vm401 = vcmp.ge.s32.totalorder %v400, 0
          %vm402 = vcmp.lt.s32.totalorder %v400, 8
          %vm403 = vmand %vm401, %vm402
          %v404 = vld [vmem:[%s398] sm:$0xff]
          %v405 = vsel %vm403, %v404, 0.0
          %v406 = vmul.f32 %v405, %v405
          %v407 = vadd.f32 %v390, %v406
          %v408 = vadd.f32 %v391, %v406
          %v409 = vlaneseq
          %v410 = vand.u32 %v409, 127
          %v411 = vmov %v410
          %v412 = vlaneseq
          %v413 = vshrl.u32 %v412, 7
          %v414 = vmov %v413
          %s415 = smov [#allocation13]
          %v416 = vlaneseq
          %v417 = vand.u32 %v416, 127
          %vm418 = vcmp.ge.s32.totalorder %v417, 0
          %vm419 = vcmp.lt.s32.totalorder %v417, 8
          %vm420 = vmand %vm418, %vm419
          %v421 = vld [vmem:[%s415] sm:$0xff]
          %v422 = vsel %vm420, %v421, 0.0
          %v423 = vmul.f32 %v422, %v422
          %vm426 = vcmp.eq.s32.totalorder %v414, %v411
          %v427 = vsel %vm426, 0.0, %v423
          %v428 = vadd.f32 %v407, %v427
          %v429 = vadd.f32 %v408, %v423
          %430 = vadd.xlane.f32.xlu0 %v429
          %v431 = vpop.xlane.xlu0 %430
          %v432 = vrot.slane %v431, 4
          %v433 = vadd.f32 %v431, %v432
          %v434 = vrot.slane %v433, 2
          %v435 = vadd.f32 %v433, %v434
          %v436 = vrot.slane %v435, 1
          %v437 = vadd.f32 %v435, %v436
          %438 = vadd.xlane.f32.xlu0 %v428
          %v439 = vpop.xlane.xlu0 %438
          %v440 = vrot.slane %v439, 4
          %v441 = vadd.f32 %v439, %v440
          %v442 = vrot.slane %v441, 2
          %v443 = vadd.f32 %v441, %v442
          %v444 = vrot.slane %v443, 1
          %v445 = vadd.f32 %v443, %v444
          %s446 = vtos %v445
          %s447 = vtos %v437
          %s448 = smul.f32 1e-10, %s447
          %p449 = scmp.le.f32.partialorder %s446, %s448
          %p450 = scmp.ge.s32.totalorder %s355, 15
          %p451 = por %p449, %p450
        $region159: #{custom-call.2} parent=155 // loop_header_branch
          %939 = sbr.rel (%p451) target = $region163
        $region160: #{custom-call.2} parent=155 // loop_body
          loop: start=0, step=1, limit=15
          $region164: #{custom-call.2} parent=160 // loop_pre_header
            _
          $region165: #{custom-call.2} parent=160 // loop_header
            %s453 = sphi 0, %s457
            %p454 = scmp.ge.s32.totalorder %s453, 15
          $region166: #{custom-call.2} parent=160 // loop_header_branch
            %456 = sbr.rel (%p454) target = $region170
          $region167: #{custom-call.2} parent=160 // loop_body
            #allocation14 [shape = 'f32[1024]{0}', space=vmem, size = 0x1000, scoped, tag = 'a_tl_diag vmem']
            #allocation15 [shape = 'f32[1024]{0}', space=vmem, size = 0x1000, scoped, tag = 'a_tr_diag vmem']
            #allocation16 [shape = 'f32[1024]{0}', space=vmem, size = 0x1000, scoped, tag = 'a_br_diag vmem']
            #allocation17 [shape = 'f32[1024]{0}', space=vmem, size = 0x1000, scoped, tag = 'rt1 vmem']
            #allocation18 [shape = 'f32[1024]{0}', space=vmem, size = 0x1000, scoped, tag = 'rt2 vmem']
            #allocation19 [shape = 'f32[1024]{0}', space=vmem, size = 0x1000, scoped, tag = 'c vmem']
            #allocation20 [shape = 'f32[1024]{0}', space=vmem, size = 0x1000, scoped, tag = 's vmem']
            #allocation21 [shape = 'f32[4096]{0}', space=vmem, size = 0x4000, scoped, tag = 'c broadcast']
            #allocation22 [shape = 'f32[4096]{0}', space=vmem, size = 0x4000, scoped, tag = 's broadcast']
            %s458 = smov [#allocation10]
            %s459 = smov [#allocation14]
            %v460 = vlaneseq
            %v461 = vand.u32 %v460, 127
            %v462 = vmov %v461
            %v463 = vlaneseq
            %v464 = vshrl.u32 %v463, 7
            %v465 = vmov %v464
            %v466 = vld [vmem:[%s458] sm:$0xff]
            %vm469 = vcmp.eq.s32.totalorder %v465, %v462
            %v470 = vsel %vm469, %v466, 0.0
            %v471 = vrot.slane %v470, 4
            %v472 = vadd.f32 %v470, %v471
            %v473 = vrot.slane %v472, 2
            %v474 = vadd.f32 %v472, %v473
            %v475 = vrot.slane %v474, 1
            %v476 = vadd.f32 %v474, %v475
            %477 = vst [vmem:[%s459] sm:$0x1] %v476
            %s478 = smov [#allocation11]
            %s479 = smov [#allocation15]
            %v480 = vlaneseq
            %v481 = vand.u32 %v480, 127
            %v482 = vmov %v481
            %v483 = vlaneseq
            %v484 = vshrl.u32 %v483, 7
            %v485 = vmov %v484
            %v486 = vld [vmem:[%s478] sm:$0xff]
            %vm489 = vcmp.eq.s32.totalorder %v485, %v482
            %v490 = vsel %vm489, %v486, 0.0
            %v491 = vrot.slane %v490, 4
            %v492 = vadd.f32 %v490, %v491
            %v493 = vrot.slane %v492, 2
            %v494 = vadd.f32 %v492, %v493
            %v495 = vrot.slane %v494, 1
            %v496 = vadd.f32 %v494, %v495
            %497 = vst [vmem:[%s479] sm:$0x1] %v496
            %s498 = smov [#allocation13]
            %s499 = smov [#allocation16]
            %v500 = vlaneseq
            %v501 = vand.u32 %v500, 127
            %v502 = vmov %v501
            %v503 = vlaneseq
            %v504 = vshrl.u32 %v503, 7
            %v505 = vmov %v504
            %v506 = vld [vmem:[%s498] sm:$0xff]
            %vm509 = vcmp.eq.s32.totalorder %v505, %v502
            %v510 = vsel %vm509, %v506, 0.0
            %v511 = vrot.slane %v510, 4
            %v512 = vadd.f32 %v510, %v511
            %v513 = vrot.slane %v512, 2
            %v514 = vadd.f32 %v512, %v513
            %v515 = vrot.slane %v514, 1
            %v516 = vadd.f32 %v514, %v515
            %517 = vst [vmem:[%s499] sm:$0x1] %v516
            %s518 = smov [#allocation19]
            %s519 = smov [#allocation20]
            %s520 = smov [#allocation14]
            %v521 = vld [vmem:[%s520] sm:$0xff]
            %s522 = smov [#allocation15]
            %v523 = vld [vmem:[%s522] sm:$0xff]
            %s524 = smov [#allocation16]
            %v525 = vld [vmem:[%s524] sm:$0xff]
            %v526 = vsub.f32 %v525, %v521
            %v527 = vmul.f32 2.0, %v523
            %v528 = vrcp.pop %v527
            %v529 = vmul.f32 %v527, %v528
            %v530 = vsub.f32 1.0, %v529
            %v531 = vmul.f32 %v528, %v530
            %v532 = vadd.f32 %v528, %v531
            %vm533 = vweird.f32 %v527
            %vm534 = vweird.f32 %v528
            %vm535 = vmor %vm533, %vm534
            %v536 = vsel %vm535, %v528, %v532
            %v537 = vand.u32 2147483647, %v527
            %vm538 = vcmp.eq.f32.partialorder %v537, 8.507059e+37
            %v539 = vand.u32 %v527, 2147483648
            %v540 = vor.u32 1.1754944e-38, %v539
            %v541 = vsel %vm538, %v540, %v536
            %v542 = vmul.f32 %v526, %v541
            %vm543 = vcmp.ge.f32.partialorder %v542, 0.0
            %v544 = vmul.f32 %v542, %v542
            %v545 = vadd.f32 1.0, %v544
            %v546 = vrsqrt.pop %v545
            %v547 = vmul.f32 %v546, %v545
            %v548 = vmul.f32 %v547, %v546
            %v549 = vmul.f32 0.5, %v548
            %v550 = vsub.f32 1.5, %v549
            %v551 = vmul.f32 %v546, %v550
            %v552 = vmul.f32 %v545, %v551
            %vm553 = vcmp.eq.f32.partialorder %v545, inf
            %v554 = vsel %vm553, %v545, %v552
            %vm555 = vcmp.eq.f32.partialorder %v545, 0.0
            %v556 = vand.u32 %v545, 2147483648
            %v557 = vsel %vm555, %v556, %v554
            %v558 = vxor.u32 %v557, 2147483648
            %v559 = vsel %vm543, %v557, %v558
            %v560 = vadd.f32 %v542, %v559
            %v561 = vrcp.pop %v560
            %v562 = vmul.f32 %v560, %v561
            %v563 = vsub.f32 1.0, %v562
            %v564 = vmul.f32 %v561, %v563
            %v565 = vadd.f32 %v561, %v564
            %vm566 = vweird.f32 %v560
            %vm567 = vweird.f32 %v561
            %vm568 = vmor %vm566, %vm567
            %v569 = vsel %vm568, %v561, %v565
            %v570 = vand.u32 2147483647, %v560
            %vm571 = vcmp.eq.f32.partialorder %v570, 8.507059e+37
            %v572 = vand.u32 %v560, 2147483648
            %v573 = vor.u32 1.1754944e-38, %v572
            %v574 = vsel %vm571, %v573, %v569
            %v575 = vand.u32 2147483647, %v521
            %v576 = vand.u32 2147483647, %v523
            %v577 = vand.u32 2147483647, %v525
            %v578 = vmin.f32 %v575, %v577
            %v579 = vmul.f32 1.1920929e-08, %v578
            %vm580 = vcmp.le.f32.partialorder %v576, %v579
            %v581 = vsel %vm580, 0.0, %v574
            %v582 = vmul.f32 %v581, %v581
            %v583 = vadd.f32 1.0, %v582
            %v584 = vrsqrt.pop %v583
            %v585 = vmul.f32 %v584, %v583
            %v586 = vmul.f32 %v585, %v584
            %v587 = vmul.f32 0.5, %v586
            %v588 = vsub.f32 1.5, %v587
            %v589 = vmul.f32 %v584, %v588
            %vm590 = vweird.f32 %v583
            %vm591 = vweird.f32 %v584
            %vm592 = vmor %vm590, %vm591
            %v593 = vsel %vm592, %v584, %v589
            %v594 = vmul.f32 %v581, %v593
            %v595 = vmul.f32 %v581, %v523
            %v596 = vsub.f32 %v521, %v595
            %v597 = vmul.f32 %v581, %v523
            %v598 = vadd.f32 %v525, %v597
            %s599 = smov [#allocation17]
            %600 = vst [vmem:[%s599] sm:$0xff] %v596
            %s601 = smov [#allocation18]
            %602 = vst [vmem:[%s601] sm:$0xff] %v598
            %s603 = smov %s518
            %604 = vst [vmem:[%s603] sm:$0xff] %v593
            %s605 = smov %s519
            %606 = vst [vmem:[%s605] sm:$0xff] %v594
            %s607 = smov [#allocation19]
            %v608 = vld [vmem:[%s607] ss:$0 sm:$0xff]
            %v609 = vlaneseq
            %v610 = vand.u32 %v609, 127
            %v611 = vmov %v610
            %v612 = vlaneseq
            %v613 = vshrl.u32 %v612, 7
            %v614 = vmov %v613
            %vm616 = vcmp.eq.s32.totalorder %v614, %v611
            %v617 = vsel %vm616, %v608, 0.0
            %618 = vadd.xlane.f32.xlu0 %v617
            %v619 = vpop.xlane.xlu0 %618
            %s620 = smov [#allocation21]
            %621 = vst [vmem:[%s620] sm:$0xff] %v619
            %s622 = smov [#allocation20]
            %v623 = vld [vmem:[%s622] ss:$0 sm:$0xff]
            %v624 = vlaneseq
            %v625 = vand.u32 %v624, 127
            %v626 = vmov %v625
            %v627 = vlaneseq
            %v628 = vshrl.u32 %v627, 7
            %v629 = vmov %v628
            %vm631 = vcmp.eq.s32.totalorder %v629, %v626
            %v632 = vsel %vm631, %v623, 0.0
            %633 = vadd.xlane.f32.xlu0 %v632
            %v634 = vpop.xlane.xlu0 %633
            %s635 = smov [#allocation22]
            %636 = vst [vmem:[%s635] sm:$0xff] %v634
            %s637 = smov [#allocation21]
            %v638 = vld [vmem:[%s637] sm:$0xff]
            %s639 = smov [#allocation22]
            %v640 = vld [vmem:[%s639] sm:$0xff]
            %s641 = smov [#allocation10]
            %s642 = smov [#allocation11]
            %s643 = smov [#allocation12]
            %s644 = smov [#allocation13]
            %v645 = vld [vmem:[%s641] sm:$0xff]
            %v646 = vld [vmem:[%s642] sm:$0xff]
            %v647 = vld [vmem:[%s643] sm:$0xff]
            %v648 = vld [vmem:[%s644] sm:$0xff]
            %v649 = vmul.f32 %v638, %v645
            %v650 = vmul.f32 %v640, %v647
            %v651 = vsub.f32 %v649, %v650
            %v652 = vmul.f32 %v638, %v646
            %v653 = vmul.f32 %v640, %v648
            %v654 = vsub.f32 %v652, %v653
            %v655 = vmul.f32 %v640, %v645
            %v656 = vmul.f32 %v638, %v647
            %v657 = vadd.f32 %v655, %v656
            %v658 = vmul.f32 %v640, %v646
            %v659 = vmul.f32 %v638, %v648
            %v660 = vadd.f32 %v658, %v659
            %661 = vst [vmem:[%s641] sm:$0xff] %v651
            %662 = vst [vmem:[%s642] sm:$0xff] %v654
            %663 = vst [vmem:[%s643] sm:$0xff] %v657
            %664 = vst [vmem:[%s644] sm:$0xff] %v660
            %s665 = smov [#allocation19]
            %v666 = vld [vmem:[%s665] ss:$0 sm:$0xff]
            %s667 = smov [#allocation20]
            %v668 = vld [vmem:[%s667] ss:$0 sm:$0xff]
            %s669 = smov [#allocation10]
            %s670 = smov [#allocation11]
            %s671 = smov [#allocation12]
            %s672 = smov [#allocation13]
            %v673 = vld [vmem:[%s669] sm:$0xff]
            %v674 = vld [vmem:[%s670] sm:$0xff]
            %v675 = vld [vmem:[%s671] sm:$0xff]
            %v676 = vld [vmem:[%s672] sm:$0xff]
            %v677 = vmul.f32 %v666, %v673
            %v678 = vmul.f32 %v668, %v674
            %v679 = vsub.f32 %v677, %v678
            %v680 = vmul.f32 %v668, %v673
            %v681 = vmul.f32 %v666, %v674
            %v682 = vadd.f32 %v680, %v681
            %v683 = vmul.f32 %v666, %v675
            %v684 = vmul.f32 %v668, %v676
            %v685 = vsub.f32 %v683, %v684
            %v686 = vmul.f32 %v668, %v675
            %v687 = vmul.f32 %v666, %v676
            %v688 = vadd.f32 %v686, %v687
            %689 = vst [vmem:[%s669] sm:$0xff] %v679
            %690 = vst [vmem:[%s670] sm:$0xff] %v682
            %691 = vst [vmem:[%s671] sm:$0xff] %v685
            %692 = vst [vmem:[%s672] sm:$0xff] %v688
            %s693 = smov [#allocation10]
            %s694 = smov [#allocation17]
            %v695 = vlaneseq
            %v696 = vand.u32 %v695, 127
            %v697 = vmov %v696
            %v698 = vlaneseq
            %v699 = vshrl.u32 %v698, 7
            %v700 = vmov %v699
            %v701 = vld [vmem:[%s694] ss:$0 sm:$0xff]
            %v702 = vld [vmem:[%s693] sm:$0xff]
            %vm705 = vcmp.eq.s32.totalorder %v700, %v697
            %v706 = vsel %vm705, %v701, %v702
            %707 = vst [vmem:[%s693] sm:$0xff] %v706
            %s708 = smov [#allocation11]
            %v709 = vlaneseq
            %v710 = vand.u32 %v709, 127
            %v711 = vmov %v710
            %v712 = vlaneseq
            %v713 = vshrl.u32 %v712, 7
            %v714 = vmov %v713
            %v715 = vld [vmem:[%s708] sm:$0xff]
            %vm718 = vcmp.eq.s32.totalorder %v714, %v711
            %v719 = vsel %vm718, 0.0, %v715
            %720 = vst [vmem:[%s708] sm:$0xff] %v719
            %s721 = smov [#allocation12]
            %v722 = vlaneseq
            %v723 = vand.u32 %v722, 127
            %v724 = vmov %v723
            %v725 = vlaneseq
            %v726 = vshrl.u32 %v725, 7
            %v727 = vmov %v726
            %v728 = vld [vmem:[%s721] sm:$0xff]
            %vm731 = vcmp.eq.s32.totalorder %v727, %v724
            %v732 = vsel %vm731, 0.0, %v728
            %733 = vst [vmem:[%s721] sm:$0xff] %v732
            %s734 = smov [#allocation13]
            %s735 = smov [#allocation18]
            %v736 = vlaneseq
            %v737 = vand.u32 %v736, 127
            %v738 = vmov %v737
            %v739 = vlaneseq
            %v740 = vshrl.u32 %v739, 7
            %v741 = vmov %v740
            %v742 = vld [vmem:[%s735] ss:$0 sm:$0xff]
            %v743 = vld [vmem:[%s734] sm:$0xff]
            %vm746 = vcmp.eq.s32.totalorder %v741, %v738
            %v747 = vsel %vm746, %v742, %v743
            %748 = vst [vmem:[%s734] sm:$0xff] %v747
            %s749 = smov [#allocation10]
            %s750 = smov [#allocation11]
            %v751 = vld [vmem:[%s750] sm:$0xff]
            %752 = vrot.lane.b32.xlu0 %v751, 1
            %v753 = vpop.permute.xlu0 %752
            %v754 = vld [vmem:[%s749] sm:$0xff]
            %v755 = vld [vmem:[%s749] sm:$0xff]
            %756 = vrot.lane.b32.xlu0 %v755, 1
            %v757 = vpop.permute.xlu0 %756
            %v758 = vlaneseq
            %v759 = vand.u32 %v758, 127
            %vm760 = vcmp.eq.s32.totalorder %v759, 0
            %v761 = vsel %vm760, %v755, %v757
            %v762 = vlaneseq
            %v763 = vand.u32 %v762, 127
            %vm764 = vcmp.eq.s32.totalorder %v763, 1
            %v765 = vsel %vm764, %v753, %v761
            %v766 = vlaneseq
            %v767 = vand.u32 %v766, 127
            %vm768 = vcmp.ge.s32.totalorder %v767, 0
            %vm769 = vcmp.lt.s32.totalorder %v767, 8
            %vm770 = vmand %vm768, %vm769
            %v771 = vsel %vm770, %v765, 0.0
            %v772 = vld [vmem:[%s750] sm:$0xff]
            %773 = vrot.lane.b32.xlu0 %v772, 127
            %v774 = vpop.permute.xlu0 %773
            %v775 = vlaneseq
            %v776 = vand.u32 %v775, 127
            %vm777 = vcmp.eq.s32.totalorder %v776, 7
            %v778 = vsel %vm777, %v754, %v774
            %779 = vst [vmem:[%s749] sm:$0xff] %v771
            %780 = vst [vmem:[%s750] sm:$0xff] %v778
            %s781 = smov [#allocation12]
            %s782 = smov [#allocation13]
            %v783 = vld [vmem:[%s782] sm:$0xff]
            %784 = vrot.lane.b32.xlu0 %v783, 1
            %v785 = vpop.permute.xlu0 %784
            %v786 = vld [vmem:[%s781] sm:$0xff]
            %v787 = vld [vmem:[%s781] sm:$0xff]
            %788 = vrot.lane.b32.xlu0 %v787, 1
            %v789 = vpop.permute.xlu0 %788
            %v790 = vlaneseq
            %v791 = vand.u32 %v790, 127
            %vm792 = vcmp.eq.s32.totalorder %v791, 0
            %v793 = vsel %vm792, %v787, %v789
            %v794 = vlaneseq
            %v795 = vand.u32 %v794, 127
            %vm796 = vcmp.eq.s32.totalorder %v795, 1
            %v797 = vsel %vm796, %v785, %v793
            %v798 = vlaneseq
            %v799 = vand.u32 %v798, 127
            %vm800 = vcmp.ge.s32.totalorder %v799, 0
            %vm801 = vcmp.lt.s32.totalorder %v799, 8
            %vm802 = vmand %vm800, %vm801
            %v803 = vsel %vm802, %v797, 0.0
            %v804 = vld [vmem:[%s782] sm:$0xff]
            %805 = vrot.lane.b32.xlu0 %v804, 127
            %v806 = vpop.permute.xlu0 %805
            %v807 = vlaneseq
            %v808 = vand.u32 %v807, 127
            %vm809 = vcmp.eq.s32.totalorder %v808, 7
            %v810 = vsel %vm809, %v786, %v806
            %811 = vst [vmem:[%s781] sm:$0xff] %v803
            %812 = vst [vmem:[%s782] sm:$0xff] %v810
            %s813 = smov [#allocation10]
            %s814 = smov [#allocation12]
            %v815 = vld [vmem:[%s813] ss:$0 sm:$0xff]
            %s817 = scalar_lea.vmem %s813, 4294967295
            %v818 = vld [vmem:[%s817] sm:$0xfe]
            %v819 = vlaneseq
            %v820 = vshrl.u32 %v819, 7
            %vm821 = vcmp.eq.s32.totalorder %v820, 0
            %v822 = vsel %vm821, %v815, %v818
            %s823 = scalar_lea.vmem %s813, 7
            %v824 = vld [vmem:[%s823] ss:$0 sm:$0xff]
            %825 = vst [vmem:[%s813] sm:$0xff] %v822
            %v826 = vld [vmem:[%s814] ss:$0 sm:$0xff]
            %s827 = scalar_lea.vmem %s813, 1
            %828 = vst [vmem:[%s827] sm:$0x1] %v826
            %s829 = scalar_lea.vmem %s814, 1
            %v830 = vld [vmem:[%s829] sm:$0x7f]
            %v831 = vlaneseq
            %v832 = vshrl.u32 %v831, 7
            %vm833 = vcmp.eq.s32.totalorder %v832, 7
            %v834 = vsel %vm833, %v824, %v830
            %v835 = vld [vmem:[%s814] ss:$0 sm:$0xff]
            %836 = vst [vmem:[%s814] sm:$0xff] %v834
            %s837 = smov [#allocation11]
            %s838 = smov [#allocation13]
            %v839 = vld [vmem:[%s837] ss:$0 sm:$0xff]
            %s841 = scalar_lea.vmem %s837, 4294967295
            %v842 = vld [vmem:[%s841] sm:$0xfe]
            %v843 = vlaneseq
            %v844 = vshrl.u32 %v843, 7
            %vm845 = vcmp.eq.s32.totalorder %v844, 0
            %v846 = vsel %vm845, %v839, %v842
            %s847 = scalar_lea.vmem %s837, 7
            %v848 = vld [vmem:[%s847] ss:$0 sm:$0xff]
            %849 = vst [vmem:[%s837] sm:$0xff] %v846
            %v850 = vld [vmem:[%s838] ss:$0 sm:$0xff]
            %s851 = scalar_lea.vmem %s837, 1
            %852 = vst [vmem:[%s851] sm:$0x1] %v850
            %s853 = scalar_lea.vmem %s838, 1
            %v854 = vld [vmem:[%s853] sm:$0x7f]
            %v855 = vlaneseq
            %v856 = vshrl.u32 %v855, 7
            %vm857 = vcmp.eq.s32.totalorder %v856, 7
            %v858 = vsel %vm857, %v848, %v854
            %v859 = vld [vmem:[%s838] ss:$0 sm:$0xff]
            %860 = vst [vmem:[%s838] sm:$0xff] %v858
            %s861 = smov [#allocation21]
            %v862 = vld [vmem:[%s861] sm:$0xff]
            %s863 = smov [#allocation22]
            %v864 = vld [vmem:[%s863] sm:$0xff]
            %s865 = smov %s297
            %s866 = smov %s301
            %s867 = smov %s305
            %s868 = smov %s309
            %v869 = vld [vmem:[%s865] sm:$0xff]
            %v870 = vld [vmem:[%s866] sm:$0xff]
            %v871 = vld [vmem:[%s867] sm:$0xff]
            %v872 = vld [vmem:[%s868] sm:$0xff]
            %v873 = vmul.f32 %v862, %v869
            %v874 = vmul.f32 %v864, %v871
            %v875 = vsub.f32 %v873, %v874
            %v876 = vmul.f32 %v862, %v870
            %v877 = vmul.f32 %v864, %v872
            %v878 = vsub.f32 %v876, %v877
            %v879 = vmul.f32 %v864, %v869
            %v880 = vmul.f32 %v862, %v871
            %v881 = vadd.f32 %v879, %v880
            %v882 = vmul.f32 %v864, %v870
            %v883 = vmul.f32 %v862, %v872
            %v884 = vadd.f32 %v882, %v883
            %885 = vst [vmem:[%s865] sm:$0xff] %v875
            %886 = vst [vmem:[%s866] sm:$0xff] %v878
            %887 = vst [vmem:[%s867] sm:$0xff] %v881
            %888 = vst [vmem:[%s868] sm:$0xff] %v884
            %s889 = smov %s297
            %s890 = smov %s305
            %v891 = vld [vmem:[%s889] ss:$0 sm:$0xff]
            %s893 = scalar_lea.vmem %s889, 4294967295
            %v894 = vld [vmem:[%s893] sm:$0xfe]
            %v895 = vlaneseq
            %v896 = vshrl.u32 %v895, 7
            %vm897 = vcmp.eq.s32.totalorder %v896, 0
            %v898 = vsel %vm897, %v891, %v894
            %s899 = scalar_lea.vmem %s889, 7
            %v900 = vld [vmem:[%s899] ss:$0 sm:$0xff]
            %901 = vst [vmem:[%s889] sm:$0xff] %v898
            %v902 = vld [vmem:[%s890] ss:$0 sm:$0xff]
            %s903 = scalar_lea.vmem %s889, 1
            %904 = vst [vmem:[%s903] sm:$0x1] %v902
            %s905 = scalar_lea.vmem %s890, 1
            %v906 = vld [vmem:[%s905] sm:$0x7f]
            %v907 = vlaneseq
            %v908 = vshrl.u32 %v907, 7
            %vm909 = vcmp.eq.s32.totalorder %v908, 7
            %v910 = vsel %vm909, %v900, %v906
            %v911 = vld [vmem:[%s890] ss:$0 sm:$0xff]
            %912 = vst [vmem:[%s890] sm:$0xff] %v910
            %s913 = smov %s301
            %s914 = smov %s309
            %v915 = vld [vmem:[%s913] ss:$0 sm:$0xff]
            %s917 = scalar_lea.vmem %s913, 4294967295
            %v918 = vld [vmem:[%s917] sm:$0xfe]
            %v919 = vlaneseq
            %v920 = vshrl.u32 %v919, 7
            %vm921 = vcmp.eq.s32.totalorder %v920, 0
            %v922 = vsel %vm921, %v915, %v918
            %s923 = scalar_lea.vmem %s913, 7
            %v924 = vld [vmem:[%s923] ss:$0 sm:$0xff]
            %925 = vst [vmem:[%s913] sm:$0xff] %v922
            %v926 = vld [vmem:[%s914] ss:$0 sm:$0xff]
            %s927 = scalar_lea.vmem %s913, 1
            %928 = vst [vmem:[%s927] sm:$0x1] %v926
            %s929 = scalar_lea.vmem %s914, 1
            %v930 = vld [vmem:[%s929] sm:$0x7f]
            %v931 = vlaneseq
            %v932 = vshrl.u32 %v931, 7
            %vm933 = vcmp.eq.s32.totalorder %v932, 7
            %v934 = vsel %vm933, %v924, %v930
            %v935 = vld [vmem:[%s914] ss:$0 sm:$0xff]
            %936 = vst [vmem:[%s914] sm:$0xff] %v934
          $region168: #{custom-call.2} parent=160 // loop_footer
            %s457 = sadd.s32 1, %s453
          $region169: #{custom-call.2} parent=160 // loop_footer_branch
            %452 = sbr.rel target = $region165
          $region170: #{custom-call.2} parent=160 // loop_exit
            _
          %s937 = sadd.s32 %s355, 1
        $region161: #{custom-call.2} parent=155 // loop_footer
          _
        $region162: #{custom-call.2} parent=155 // loop_footer_branch
          %354 = sbr.rel target = $region158
        $region163: #{custom-call.2} parent=155 // loop_exit
          _
        %s940 = sand.u32 %s17, 7
        %s941 = scalar_lea.vmem %s287, %s940 [#allocation4]
        %s942 = sand.u32 %s17, 7
        %s943 = scalar_lea.vmem %s293, %s942 [#allocation5]
        %s944 = smov [#allocation10]
        %s945 = smov %s941
        %v946 = vlaneseq
        %v947 = vand.u32 %v946, 127
        %v948 = vmov %v947
        %v949 = vlaneseq
        %v950 = vshrl.u32 %v949, 7
        %v951 = vmov %v950
        %v952 = vld [vmem:[%s944] sm:$0xff]
        %vm955 = vcmp.eq.s32.totalorder %v951, %v948
        %v956 = vsel %vm955, %v952, 0.0
        %v957 = vrot.slane %v956, 4
        %v958 = vadd.f32 %v956, %v957
        %v959 = vrot.slane %v958, 2
        %v960 = vadd.f32 %v958, %v959
        %v961 = vrot.slane %v960, 1
        %v962 = vadd.f32 %v960, %v961
        %963 = vst [vmem:[%s945] sm:$0x1] %v962
        %s964 = smov [#allocation13]
        %s965 = smov %s943
        %v966 = vlaneseq
        %v967 = vand.u32 %v966, 127
        %v968 = vmov %v967
        %v969 = vlaneseq
        %v970 = vshrl.u32 %v969, 7
        %v971 = vmov %v970
        %v972 = vld [vmem:[%s964] sm:$0xff]
        %vm975 = vcmp.eq.s32.totalorder %v971, %v968
        %v976 = vsel %vm975, %v972, 0.0
        %v977 = vrot.slane %v976, 4
        %v978 = vadd.f32 %v976, %v977
        %v979 = vrot.slane %v978, 2
        %v980 = vadd.f32 %v978, %v979
        %v981 = vrot.slane %v980, 1
        %v982 = vadd.f32 %v980, %v981
        %983 = vst [vmem:[%s965] sm:$0x1] %v982
        %s984 = sand.u32 %s27, 1
        %s985 = sand.u32 %s27, 1
        %s986 = smul.addr %s985, 8
        %s987 = scalar_lea.vmem [#allocation4], %s986
        %s988 = sand.u32 %s55, 1
        %s989 = sand.u32 %s55, 1
        %s990 = smul.addr %s989, 8
        %s991 = scalar_lea.vmem [#allocation5], %s990
        %s992 = sand.u32 %s17, 1
        %s993 = sand.u32 %s17, 1
        %s994 = smul.addr %s993, 8
        %s995 = scalar_lea.vmem [#allocation6], %s994
        %s996 = sand.u32 %s17, 1
        %s997 = sand.u32 %s17, 1
        %s998 = smul.addr %s997, 8
        %s999 = scalar_lea.vmem [#allocation7], %s998
        %s1000 = sand.u32 %s17, 1
        %s1001 = sand.u32 %s17, 1
        %s1002 = smul.addr %s1001, 8
        %s1003 = scalar_lea.vmem [#allocation8], %s1002
        %s1004 = sand.u32 %s17, 1
        %s1005 = sand.u32 %s17, 1
        %s1006 = smul.addr %s1005, 8
        %s1007 = scalar_lea.vmem [#allocation9], %s1006
        // Predicated region
        $region171: #{custom-call.2} parent=155 // pred_check
          %p1008 = pneg %p37
        $region172: #{custom-call.2} parent=155 // pred_check_branch
          %1010 = sbr.rel (%p1008) target = $region174
        $region173: #{custom-call.2} parent=155 // pred_region
          %s1011 = sshrl.u32 %s17, 3
          %s1012 = smul.addr %s1011, 8
          %s1013 = scalar_lea.vmem %s4, %s1012
          // Predicated region
          $region175: #{custom-call.2} parent=173 // pred_check
            _
          $region176: #{custom-call.2} parent=173 // pred_check_branch
            %1015 = sbr.rel (0) target = $region178
          $region177: #{custom-call.2} parent=173 // pred_region
            // Predicated region
            $region179: #{custom-call.2} parent=177 // pred_check
              _
            $region180: #{custom-call.2} parent=177 // pred_check_branch
              %1017 = sbr.rel (0) target = $region182
            $region181: #{custom-call.2} parent=177 // pred_region
              // Predicated region
              $region194: #{custom-call.2} parent=181 // pred_check
                _
              $region195: #{custom-call.2} parent=181 // pred_check_branch
                %1033 = sbr.rel (0) target = $region197
              $region196: #{custom-call.2} parent=181 // pred_region
                loop: start=0, step=1, limit=1
                $region198: #{custom-call.2} parent=196 // loop_pre_header
                  _
                $region199: #{custom-call.2} parent=196 // loop_header
                  %s1035 = sphi 0, %s1039
                  %p1036 = scmp.ge.s32.totalorder %s1035, 1
                  %s1040 = sphi %s987, %s987
                  %s1041 = sphi %s1013, %s1013
                $region200: #{custom-call.2} parent=196 // loop_header_branch
                  %1038 = sbr.rel (%p1036) target = $region204
                $region201: #{custom-call.2} parent=196 // loop_body
                  %v1042 = vld [vmem:[%s1040] sm:$0xff]
                  %1043 = vst [vmem:[%s1041] sm:$0xff] %v1042
                $region202: #{custom-call.2} parent=196 // loop_footer
                  %s1039 = sadd.s32 1, %s1035
                $region203: #{custom-call.2} parent=196 // loop_footer_branch
                  %1034 = sbr.rel target = $region199
                $region204: #{custom-call.2} parent=196 // loop_exit
                  _
              $region197: #{custom-call.2} parent=181 // pred_fallthru
                _
              // Predicated region
              $region205: #{custom-call.2} parent=181 // pred_check
                _
              $region206: #{custom-call.2} parent=181 // pred_check_branch
                %1045 = sbr.rel target = $region208
              $region207: #{custom-call.2} parent=181 // pred_region
                _
              $region208: #{custom-call.2} parent=181 // pred_fallthru
                _
            $region182: #{custom-call.2} parent=177 // pred_fallthru
              _
            // Predicated region
            $region183: #{custom-call.2} parent=177 // pred_check
              _
            $region184: #{custom-call.2} parent=177 // pred_check_branch
              %1019 = sbr.rel target = $region186
            $region185: #{custom-call.2} parent=177 // pred_region
              %s1021 = ssub.s32 256, 1
              loop: start=0, step=1, limit=1
              $region187: #{custom-call.2} parent=185 // loop_pre_header
                _
              $region188: #{custom-call.2} parent=185 // loop_header
                %s1023 = sphi 0, %s1027
                %p1024 = scmp.ge.s32.totalorder %s1023, 1
                %s1028 = sphi %s987, %s987
                %s1029 = sphi %s1013, %s1013
              $region189: #{custom-call.2} parent=185 // loop_header_branch
                %1026 = sbr.rel (%p1024) target = $region193
              $region190: #{custom-call.2} parent=185 // loop_body
                %v1030 = vld [vmem:[%s1028] sm:%s1021]
                %1031 = vst [vmem:[%s1029] sm:%s1021] %v1030
              $region191: #{custom-call.2} parent=185 // loop_footer
                %s1027 = sadd.s32 1, %s1023
              $region192: #{custom-call.2} parent=185 // loop_footer_branch
                %1022 = sbr.rel target = $region188
              $region193: #{custom-call.2} parent=185 // loop_exit
                _
            $region186: #{custom-call.2} parent=177 // pred_fallthru
              _
          $region178: #{custom-call.2} parent=173 // pred_fallthru
            _
          %1046 = vnop
        $region174: #{custom-call.2} parent=155 // pred_fallthru
          _
        // Predicated region
        $region209: #{custom-call.2} parent=155 // pred_check
          %p1047 = pneg %p65
        $region210: #{custom-call.2} parent=155 // pred_check_branch
          %1049 = sbr.rel (%p1047) target = $region212
        $region211: #{custom-call.2} parent=155 // pred_region
          %s1050 = sshrl.u32 %s17, 3
          %s1051 = smul.addr %s1050, 8
          %s1052 = scalar_lea.vmem %s5, %s1051
          // Predicated region
          $region213: #{custom-call.2} parent=211 // pred_check
            _
          $region214: #{custom-call.2} parent=211 // pred_check_branch
            %1054 = sbr.rel (0) target = $region216
          $region215: #{custom-call.2} parent=211 // pred_region
            // Predicated region
            $region217: #{custom-call.2} parent=215 // pred_check
              _
            $region218: #{custom-call.2} parent=215 // pred_check_branch
              %1056 = sbr.rel (0) target = $region220
            $region219: #{custom-call.2} parent=215 // pred_region
              // Predicated region
              $region232: #{custom-call.2} parent=219 // pred_check
                _
              $region233: #{custom-call.2} parent=219 // pred_check_branch
                %1072 = sbr.rel (0) target = $region235
              $region234: #{custom-call.2} parent=219 // pred_region
                loop: start=0, step=1, limit=1
                $region236: #{custom-call.2} parent=234 // loop_pre_header
                  _
                $region237: #{custom-call.2} parent=234 // loop_header
                  %s1074 = sphi 0, %s1078
                  %p1075 = scmp.ge.s32.totalorder %s1074, 1
                  %s1079 = sphi %s991, %s991
                  %s1080 = sphi %s1052, %s1052
                $region238: #{custom-call.2} parent=234 // loop_header_branch
                  %1077 = sbr.rel (%p1075) target = $region242
                $region239: #{custom-call.2} parent=234 // loop_body
                  %v1081 = vld [vmem:[%s1079] sm:$0xff]
                  %1082 = vst [vmem:[%s1080] sm:$0xff] %v1081
                $region240: #{custom-call.2} parent=234 // loop_footer
                  %s1078 = sadd.s32 1, %s1074
                $region241: #{custom-call.2} parent=234 // loop_footer_branch
                  %1073 = sbr.rel target = $region237
                $region242: #{custom-call.2} parent=234 // loop_exit
                  _
              $region235: #{custom-call.2} parent=219 // pred_fallthru
                _
              // Predicated region
              $region243: #{custom-call.2} parent=219 // pred_check
                _
              $region244: #{custom-call.2} parent=219 // pred_check_branch
                %1084 = sbr.rel target = $region246
              $region245: #{custom-call.2} parent=219 // pred_region
                _
              $region246: #{custom-call.2} parent=219 // pred_fallthru
                _
            $region220: #{custom-call.2} parent=215 // pred_fallthru
              _
            // Predicated region
            $region221: #{custom-call.2} parent=215 // pred_check
              _
            $region222: #{custom-call.2} parent=215 // pred_check_branch
              %1058 = sbr.rel target = $region224
            $region223: #{custom-call.2} parent=215 // pred_region
              %s1060 = ssub.s32 256, 1
              loop: start=0, step=1, limit=1
              $region225: #{custom-call.2} parent=223 // loop_pre_header
                _
              $region226: #{custom-call.2} parent=223 // loop_header
                %s1062 = sphi 0, %s1066
                %p1063 = scmp.ge.s32.totalorder %s1062, 1
                %s1067 = sphi %s991, %s991
                %s1068 = sphi %s1052, %s1052
              $region227: #{custom-call.2} parent=223 // loop_header_branch
                %1065 = sbr.rel (%p1063) target = $region231
              $region228: #{custom-call.2} parent=223 // loop_body
                %v1069 = vld [vmem:[%s1067] sm:%s1060]
                %1070 = vst [vmem:[%s1068] sm:%s1060] %v1069
              $region229: #{custom-call.2} parent=223 // loop_footer
                %s1066 = sadd.s32 1, %s1062
              $region230: #{custom-call.2} parent=223 // loop_footer_branch
                %1061 = sbr.rel target = $region226
              $region231: #{custom-call.2} parent=223 // loop_exit
                _
            $region224: #{custom-call.2} parent=215 // pred_fallthru
              _
          $region216: #{custom-call.2} parent=211 // pred_fallthru
            _
          %1085 = vnop
        $region212: #{custom-call.2} parent=155 // pred_fallthru
          _
        %s1086 = smul.addr %s17, 8
        %s1087 = scalar_lea.vmem %s6, %s1086
        // Predicated region
        $region247: #{custom-call.2} parent=155 // pred_check
          _
        $region248: #{custom-call.2} parent=155 // pred_check_branch
          %1089 = sbr.rel (0) target = $region250
        $region249: #{custom-call.2} parent=155 // pred_region
          // Predicated region
          $region251: #{custom-call.2} parent=249 // pred_check
            _
          $region252: #{custom-call.2} parent=249 // pred_check_branch
            %1091 = sbr.rel (0) target = $region254
          $region253: #{custom-call.2} parent=249 // pred_region
            // Predicated region
            $region266: #{custom-call.2} parent=253 // pred_check
              _
            $region267: #{custom-call.2} parent=253 // pred_check_branch
              %1107 = sbr.rel (0) target = $region269
            $region268: #{custom-call.2} parent=253 // pred_region
              loop: start=0, step=1, limit=1
              $region270: #{custom-call.2} parent=268 // loop_pre_header
                _
              $region271: #{custom-call.2} parent=268 // loop_header
                %s1109 = sphi 0, %s1113
                %p1110 = scmp.ge.s32.totalorder %s1109, 1
                %s1114 = sphi %s995, %s995
                %s1115 = sphi %s1087, %s1087
              $region272: #{custom-call.2} parent=268 // loop_header_branch
                %1112 = sbr.rel (%p1110) target = $region276
              $region273: #{custom-call.2} parent=268 // loop_body
                %v1116 = vld [vmem:[%s1114] sm:$0xff]
                %1117 = vst [vmem:[%s1115] sm:$0xff] %v1116
              $region274: #{custom-call.2} parent=268 // loop_footer
                %s1113 = sadd.s32 1, %s1109
              $region275: #{custom-call.2} parent=268 // loop_footer_branch
                %1108 = sbr.rel target = $region271
              $region276: #{custom-call.2} parent=268 // loop_exit
                _
            $region269: #{custom-call.2} parent=253 // pred_fallthru
              _
            // Predicated region
            $region277: #{custom-call.2} parent=253 // pred_check
              _
            $region278: #{custom-call.2} parent=253 // pred_check_branch
              %1119 = sbr.rel target = $region280
            $region279: #{custom-call.2} parent=253 // pred_region
              _
            $region280: #{custom-call.2} parent=253 // pred_fallthru
              _
          $region254: #{custom-call.2} parent=249 // pred_fallthru
            _
          // Predicated region
          $region255: #{custom-call.2} parent=249 // pred_check
            _
          $region256: #{custom-call.2} parent=249 // pred_check_branch
            %1093 = sbr.rel target = $region258
          $region257: #{custom-call.2} parent=249 // pred_region
            %s1095 = ssub.s32 256, 1
            loop: start=0, step=1, limit=1
            $region259: #{custom-call.2} parent=257 // loop_pre_header
              _
            $region260: #{custom-call.2} parent=257 // loop_header
              %s1097 = sphi 0, %s1101
              %p1098 = scmp.ge.s32.totalorder %s1097, 1
              %s1102 = sphi %s995, %s995
              %s1103 = sphi %s1087, %s1087
            $region261: #{custom-call.2} parent=257 // loop_header_branch
              %1100 = sbr.rel (%p1098) target = $region265
            $region262: #{custom-call.2} parent=257 // loop_body
              %v1104 = vld [vmem:[%s1102] sm:%s1095]
              %1105 = vst [vmem:[%s1103] sm:%s1095] %v1104
            $region263: #{custom-call.2} parent=257 // loop_footer
              %s1101 = sadd.s32 1, %s1097
            $region264: #{custom-call.2} parent=257 // loop_footer_branch
              %1096 = sbr.rel target = $region260
            $region265: #{custom-call.2} parent=257 // loop_exit
              _
          $region258: #{custom-call.2} parent=249 // pred_fallthru
            _
        $region250: #{custom-call.2} parent=155 // pred_fallthru
          _
        %1120 = vnop
        %s1121 = smul.addr %s17, 8
        %s1122 = scalar_lea.vmem %s7, %s1121
        // Predicated region
        $region281: #{custom-call.2} parent=155 // pred_check
          _
        $region282: #{custom-call.2} parent=155 // pred_check_branch
          %1124 = sbr.rel (0) target = $region284
        $region283: #{custom-call.2} parent=155 // pred_region
          // Predicated region
          $region285: #{custom-call.2} parent=283 // pred_check
            _
          $region286: #{custom-call.2} parent=283 // pred_check_branch
            %1126 = sbr.rel (0) target = $region288
          $region287: #{custom-call.2} parent=283 // pred_region
            // Predicated region
            $region300: #{custom-call.2} parent=287 // pred_check
              _
            $region301: #{custom-call.2} parent=287 // pred_check_branch
              %1142 = sbr.rel (0) target = $region303
            $region302: #{custom-call.2} parent=287 // pred_region
              loop: start=0, step=1, limit=1
              $region304: #{custom-call.2} parent=302 // loop_pre_header
                _
              $region305: #{custom-call.2} parent=302 // loop_header
                %s1144 = sphi 0, %s1148
                %p1145 = scmp.ge.s32.totalorder %s1144, 1
                %s1149 = sphi %s999, %s999
                %s1150 = sphi %s1122, %s1122
              $region306: #{custom-call.2} parent=302 // loop_header_branch
                %1147 = sbr.rel (%p1145) target = $region310
              $region307: #{custom-call.2} parent=302 // loop_body
                %v1151 = vld [vmem:[%s1149] sm:$0xff]
                %1152 = vst [vmem:[%s1150] sm:$0xff] %v1151
              $region308: #{custom-call.2} parent=302 // loop_footer
                %s1148 = sadd.s32 1, %s1144
              $region309: #{custom-call.2} parent=302 // loop_footer_branch
                %1143 = sbr.rel target = $region305
              $region310: #{custom-call.2} parent=302 // loop_exit
                _
            $region303: #{custom-call.2} parent=287 // pred_fallthru
              _
            // Predicated region
            $region311: #{custom-call.2} parent=287 // pred_check
              _
            $region312: #{custom-call.2} parent=287 // pred_check_branch
              %1154 = sbr.rel target = $region314
            $region313: #{custom-call.2} parent=287 // pred_region
              _
            $region314: #{custom-call.2} parent=287 // pred_fallthru
              _
          $region288: #{custom-call.2} parent=283 // pred_fallthru
            _
          // Predicated region
          $region289: #{custom-call.2} parent=283 // pred_check
            _
          $region290: #{custom-call.2} parent=283 // pred_check_branch
            %1128 = sbr.rel target = $region292
          $region291: #{custom-call.2} parent=283 // pred_region
            %s1130 = ssub.s32 256, 1
            loop: start=0, step=1, limit=1
            $region293: #{custom-call.2} parent=291 // loop_pre_header
              _
            $region294: #{custom-call.2} parent=291 // loop_header
              %s1132 = sphi 0, %s1136
              %p1133 = scmp.ge.s32.totalorder %s1132, 1
              %s1137 = sphi %s999, %s999
              %s1138 = sphi %s1122, %s1122
            $region295: #{custom-call.2} parent=291 // loop_header_branch
              %1135 = sbr.rel (%p1133) target = $region299
            $region296: #{custom-call.2} parent=291 // loop_body
              %v1139 = vld [vmem:[%s1137] sm:%s1130]
              %1140 = vst [vmem:[%s1138] sm:%s1130] %v1139
            $region297: #{custom-call.2} parent=291 // loop_footer
              %s1136 = sadd.s32 1, %s1132
            $region298: #{custom-call.2} parent=291 // loop_footer_branch
              %1131 = sbr.rel target = $region294
            $region299: #{custom-call.2} parent=291 // loop_exit
              _
          $region292: #{custom-call.2} parent=283 // pred_fallthru
            _
        $region284: #{custom-call.2} parent=155 // pred_fallthru
          _
        %1155 = vnop
        %s1156 = smul.addr %s17, 8
        %s1157 = scalar_lea.vmem %s8, %s1156
        // Predicated region
        $region315: #{custom-call.2} parent=155 // pred_check
          _
        $region316: #{custom-call.2} parent=155 // pred_check_branch
          %1159 = sbr.rel (0) target = $region318
        $region317: #{custom-call.2} parent=155 // pred_region
          // Predicated region
          $region319: #{custom-call.2} parent=317 // pred_check
            _
          $region320: #{custom-call.2} parent=317 // pred_check_branch
            %1161 = sbr.rel (0) target = $region322
          $region321: #{custom-call.2} parent=317 // pred_region
            // Predicated region
            $region334: #{custom-call.2} parent=321 // pred_check
              _
            $region335: #{custom-call.2} parent=321 // pred_check_branch
              %1177 = sbr.rel (0) target = $region337
            $region336: #{custom-call.2} parent=321 // pred_region
              loop: start=0, step=1, limit=1
              $region338: #{custom-call.2} parent=336 // loop_pre_header
                _
              $region339: #{custom-call.2} parent=336 // loop_header
                %s1179 = sphi 0, %s1183
                %p1180 = scmp.ge.s32.totalorder %s1179, 1
                %s1184 = sphi %s1003, %s1003
                %s1185 = sphi %s1157, %s1157
              $region340: #{custom-call.2} parent=336 // loop_header_branch
                %1182 = sbr.rel (%p1180) target = $region344
              $region341: #{custom-call.2} parent=336 // loop_body
                %v1186 = vld [vmem:[%s1184] sm:$0xff]
                %1187 = vst [vmem:[%s1185] sm:$0xff] %v1186
              $region342: #{custom-call.2} parent=336 // loop_footer
                %s1183 = sadd.s32 1, %s1179
              $region343: #{custom-call.2} parent=336 // loop_footer_branch
                %1178 = sbr.rel target = $region339
              $region344: #{custom-call.2} parent=336 // loop_exit
                _
            $region337: #{custom-call.2} parent=321 // pred_fallthru
              _
            // Predicated region
            $region345: #{custom-call.2} parent=321 // pred_check
              _
            $region346: #{custom-call.2} parent=321 // pred_check_branch
              %1189 = sbr.rel target = $region348
            $region347: #{custom-call.2} parent=321 // pred_region
              _
            $region348: #{custom-call.2} parent=321 // pred_fallthru
              _
          $region322: #{custom-call.2} parent=317 // pred_fallthru
            _
          // Predicated region
          $region323: #{custom-call.2} parent=317 // pred_check
            _
          $region324: #{custom-call.2} parent=317 // pred_check_branch
            %1163 = sbr.rel target = $region326
          $region325: #{custom-call.2} parent=317 // pred_region
            %s1165 = ssub.s32 256, 1
            loop: start=0, step=1, limit=1
            $region327: #{custom-call.2} parent=325 // loop_pre_header
              _
            $region328: #{custom-call.2} parent=325 // loop_header
              %s1167 = sphi 0, %s1171
              %p1168 = scmp.ge.s32.totalorder %s1167, 1
              %s1172 = sphi %s1003, %s1003
              %s1173 = sphi %s1157, %s1157
            $region329: #{custom-call.2} parent=325 // loop_header_branch
              %1170 = sbr.rel (%p1168) target = $region333
            $region330: #{custom-call.2} parent=325 // loop_body
              %v1174 = vld [vmem:[%s1172] sm:%s1165]
              %1175 = vst [vmem:[%s1173] sm:%s1165] %v1174
            $region331: #{custom-call.2} parent=325 // loop_footer
              %s1171 = sadd.s32 1, %s1167
            $region332: #{custom-call.2} parent=325 // loop_footer_branch
              %1166 = sbr.rel target = $region328
            $region333: #{custom-call.2} parent=325 // loop_exit
              _
          $region326: #{custom-call.2} parent=317 // pred_fallthru
            _
        $region318: #{custom-call.2} parent=155 // pred_fallthru
          _
        %1190 = vnop
        %s1191 = smul.addr %s17, 8
        %s1192 = scalar_lea.vmem %s9, %s1191
        // Predicated region
        $region349: #{custom-call.2} parent=155 // pred_check
          _
        $region350: #{custom-call.2} parent=155 // pred_check_branch
          %1194 = sbr.rel (0) target = $region352
        $region351: #{custom-call.2} parent=155 // pred_region
          // Predicated region
          $region353: #{custom-call.2} parent=351 // pred_check
            _
          $region354: #{custom-call.2} parent=351 // pred_check_branch
            %1196 = sbr.rel (0) target = $region356
          $region355: #{custom-call.2} parent=351 // pred_region
            // Predicated region
            $region368: #{custom-call.2} parent=355 // pred_check
              _
            $region369: #{custom-call.2} parent=355 // pred_check_branch
              %1212 = sbr.rel (0) target = $region371
            $region370: #{custom-call.2} parent=355 // pred_region
              loop: start=0, step=1, limit=1
              $region372: #{custom-call.2} parent=370 // loop_pre_header
                _
              $region373: #{custom-call.2} parent=370 // loop_header
                %s1214 = sphi 0, %s1218
                %p1215 = scmp.ge.s32.totalorder %s1214, 1
                %s1219 = sphi %s1007, %s1007
                %s1220 = sphi %s1192, %s1192
              $region374: #{custom-call.2} parent=370 // loop_header_branch
                %1217 = sbr.rel (%p1215) target = $region378
              $region375: #{custom-call.2} parent=370 // loop_body
                %v1221 = vld [vmem:[%s1219] sm:$0xff]
                %1222 = vst [vmem:[%s1220] sm:$0xff] %v1221
              $region376: #{custom-call.2} parent=370 // loop_footer
                %s1218 = sadd.s32 1, %s1214
              $region377: #{custom-call.2} parent=370 // loop_footer_branch
                %1213 = sbr.rel target = $region373
              $region378: #{custom-call.2} parent=370 // loop_exit
                _
            $region371: #{custom-call.2} parent=355 // pred_fallthru
              _
            // Predicated region
            $region379: #{custom-call.2} parent=355 // pred_check
              _
            $region380: #{custom-call.2} parent=355 // pred_check_branch
              %1224 = sbr.rel target = $region382
            $region381: #{custom-call.2} parent=355 // pred_region
              _
            $region382: #{custom-call.2} parent=355 // pred_fallthru
              _
          $region356: #{custom-call.2} parent=351 // pred_fallthru
            _
          // Predicated region
          $region357: #{custom-call.2} parent=351 // pred_check
            _
          $region358: #{custom-call.2} parent=351 // pred_check_branch
            %1198 = sbr.rel target = $region360
          $region359: #{custom-call.2} parent=351 // pred_region
            %s1200 = ssub.s32 256, 1
            loop: start=0, step=1, limit=1
            $region361: #{custom-call.2} parent=359 // loop_pre_header
              _
            $region362: #{custom-call.2} parent=359 // loop_header
              %s1202 = sphi 0, %s1206
              %p1203 = scmp.ge.s32.totalorder %s1202, 1
              %s1207 = sphi %s1007, %s1007
              %s1208 = sphi %s1192, %s1192
            $region363: #{custom-call.2} parent=359 // loop_header_branch
              %1205 = sbr.rel (%p1203) target = $region367
            $region364: #{custom-call.2} parent=359 // loop_body
              %v1209 = vld [vmem:[%s1207] sm:%s1200]
              %1210 = vst [vmem:[%s1208] sm:%s1200] %v1209
            $region365: #{custom-call.2} parent=359 // loop_footer
              %s1206 = sadd.s32 1, %s1202
            $region366: #{custom-call.2} parent=359 // loop_footer_branch
              %1201 = sbr.rel target = $region362
            $region367: #{custom-call.2} parent=359 // loop_exit
              _
          $region360: #{custom-call.2} parent=351 // pred_fallthru
            _
        $region352: #{custom-call.2} parent=155 // pred_fallthru
          _
        %1225 = vnop
      $region156: #{custom-call.2} parent=5 // pred_fallthru
        _
      %p1226 = scmp.le.s32.totalorder 2, %s12
      // Predicated region
      $region383: #{custom-call.2} parent=5 // pred_check
        %p1227 = pneg %p1226
      $region384: #{custom-call.2} parent=5 // pred_check_branch
        %1229 = sbr.rel (%p1227) target = $region386
      $region385: #{custom-call.2} parent=5 // pred_region
        %s1230 = ssub.s32 %s12, 2
        // Predicated region
        $region387: #{custom-call.2} parent=385 // pred_check
          %p1231 = pneg %p43
        $region388: #{custom-call.2} parent=385 // pred_check_branch
          %1233 = sbr.rel (%p1231) target = $region390
        $region389: #{custom-call.2} parent=385 // pred_region
          %s1234 = sand.u32 %s28, 1
          %s1235 = sand.u32 %s28, 1
          %s1236 = smul.addr %s1235, 8
          %s1237 = scalar_lea.vmem [#allocation4], %s1236
        $region390: #{custom-call.2} parent=385 // pred_fallthru
          _
        // Predicated region
        $region391: #{custom-call.2} parent=385 // pred_check
          %p1238 = pneg %p71
        $region392: #{custom-call.2} parent=385 // pred_check_branch
          %1240 = sbr.rel (%p1238) target = $region394
        $region393: #{custom-call.2} parent=385 // pred_region
          %s1241 = sand.u32 %s56, 1
          %s1242 = sand.u32 %s56, 1
          %s1243 = smul.addr %s1242, 8
          %s1244 = scalar_lea.vmem [#allocation5], %s1243
        $region394: #{custom-call.2} parent=385 // pred_fallthru
          _
        %s1245 = sand.u32 %s18, 1
        %s1246 = sand.u32 %s18, 1
        %s1247 = smul.addr %s1246, 8
        %s1248 = scalar_lea.vmem [#allocation6], %s1247
        %s1249 = sand.u32 %s18, 1
        %s1250 = sand.u32 %s18, 1
        %s1251 = smul.addr %s1250, 8
        %s1252 = scalar_lea.vmem [#allocation7], %s1251
        %s1253 = sand.u32 %s18, 1
        %s1254 = sand.u32 %s18, 1
        %s1255 = smul.addr %s1254, 8
        %s1256 = scalar_lea.vmem [#allocation8], %s1255
        %s1257 = sand.u32 %s18, 1
        %s1258 = sand.u32 %s18, 1
        %s1259 = smul.addr %s1258, 8
        %s1260 = scalar_lea.vmem [#allocation9], %s1259
      $region386: #{custom-call.2} parent=5 // pred_fallthru
        _
    $region6: #{custom-call.2} parent=1 // loop_footer
      %s16 = sadd.s32 1, %s12
    $region7: #{custom-call.2} parent=1 // loop_footer_branch
      %11 = sbr.rel target = $region3
    $region8: #{custom-call.2} parent=1 // loop_exit
      _

// kernel: spd_rectified.1
$region0: #{spd_rectified.1}
  #allocation0 [shape = 'u32[]', space=smem, size = 0x4, offset = 0x4, fixed_abs, tag = 'smem constant byte address 0x4 - core index']
  #allocation1 [shape = 'u32[72,128]{1,0:T(1,128)}', space=vmem, size = 0x9000, scoped, tag = 'internal scratch']
  %s0 = inlined_call_operand.vmem [shape: f32[128,128], index: 0, kind: input, shape index: {}]
  %s1 = inlined_call_operand.vmem [shape: f32[1,16,128], index: 1, kind: input, shape index: {}]
  %s2 = inlined_call_operand.vmem [shape: f32[1,1,128], index: 2, kind: input, shape index: {}]
  %s3 = inlined_call_operand.vmem [shape: f32[1,16,128], index: 3, kind: output, shape index: {}]
  %s4 = sld [smem:[#allocation0]]
  $region22: #{spd_rectified.1} parent=0
    _
  %s6 = ssub.s32 1, %s4
  %s7 = scalar_select 0, %s6, %s4
  // Predicated region
  $region2: #{spd_rectified.1} parent=0 // pred_check
    _
  $region3: #{spd_rectified.1} parent=0 // pred_check_branch
    %9 = sbr.rel (0) target = $region5
  $region4: #{spd_rectified.1} parent=0 // pred_region
    _
  $region5: #{spd_rectified.1} parent=0 // pred_fallthru
    _
  // Predicated region
  $region6: #{spd_rectified.1} parent=0 // pred_check
    _
  $region7: #{spd_rectified.1} parent=0 // pred_check_branch
    %11 = sbr.rel (0) target = $region9
  $region8: #{spd_rectified.1} parent=0 // pred_region
    _
  $region9: #{spd_rectified.1} parent=0 // pred_fallthru
    _
  // Predicated region
  $region10: #{spd_rectified.1} parent=0 // pred_check
    _
  $region11: #{spd_rectified.1} parent=0 // pred_check_branch
    %13 = sbr.rel (0) target = $region13
  $region12: #{spd_rectified.1} parent=0 // pred_region
    _
  $region13: #{spd_rectified.1} parent=0 // pred_fallthru
    _
  %v14 = vld [vmem:[%s0] sm:$0xff]
  %v15 = vld [vmem:[%s0 + $0x8] sm:$0xff]
  %v16 = vld [vmem:[%s0 + $0x10] sm:$0xff]
  %v17 = vld [vmem:[%s0 + $0x18] sm:$0xff]
  %v18 = vld [vmem:[%s0 + $0x20] sm:$0xff]
  %v19 = vld [vmem:[%s0 + $0x28] sm:$0xff]
  %v20 = vld [vmem:[%s0 + $0x30] sm:$0xff]
  %v21 = vld [vmem:[%s0 + $0x38] sm:$0xff]
  %v22 = vld [vmem:[%s0 + $0x40] sm:$0xff]
  %v23 = vld [vmem:[%s0 + $0x48] sm:$0xff]
  %v24 = vld [vmem:[%s0 + $0x50] sm:$0xff]
  %v25 = vld [vmem:[%s0 + $0x58] sm:$0xff]
  %v26 = vld [vmem:[%s0 + $0x60] sm:$0xff]
  %v27 = vld [vmem:[%s0 + $0x68] sm:$0xff]
  %v28 = vld [vmem:[%s0 + $0x70] sm:$0xff]
  %v29 = vld [vmem:[%s0 + $0x78] sm:$0xff]
  %v30 = vld [vmem:[%s1] sm:$0xff]
  %v31 = vld [vmem:[%s1 + $0x8] sm:$0xff]
  %v32 = vld [vmem:[%s2] sm:$0x1]
  %v33 = vmax.f32 %v32, 0.0001
  %v35 = vperm.slane %v33, 0
  %v37 = vmul.f32 %v30, %v35
  %v38 = vmul.f32 %v31, %v35
  %v39 = vmul.f32 %v30, %v14
  %v40 = vmul.f32 %v31, %v15
  %v41 = vmul.f32 %v30, %v16
  %v42 = vmul.f32 %v31, %v17
  %v43 = vmul.f32 %v30, %v18
  %v44 = vmul.f32 %v31, %v19
  %v45 = vmul.f32 %v30, %v20
  %v46 = vmul.f32 %v31, %v21
  %v47 = vmul.f32 %v30, %v22
  %v48 = vmul.f32 %v31, %v23
  %v49 = vmul.f32 %v30, %v24
  %v50 = vmul.f32 %v31, %v25
  %v51 = vmul.f32 %v30, %v26
  %v52 = vmul.f32 %v31, %v27
  %v53 = vmul.f32 %v30, %v28
  %v54 = vmul.f32 %v31, %v29
  %v55 = vand.u32 %v54, 4294901760
  %56 = vmatpush.xpose.msra.mxu0 %v55
  %v57 = vand.u32 %v53, 4294901760
  %58 = vmatpush.xpose.msra.mxu0 %v57
  %v59 = vand.u32 %v52, 4294901760
  %60 = vmatpush.xpose.msra.mxu0 %v59
  %v61 = vand.u32 %v51, 4294901760
  %62 = vmatpush.xpose.msra.mxu0 %v61
  %v63 = vand.u32 %v50, 4294901760
  %64 = vmatpush.xpose.msra.mxu0 %v63
  %v65 = vand.u32 %v49, 4294901760
  %66 = vmatpush.xpose.msra.mxu0 %v65
  %v67 = vand.u32 %v48, 4294901760
  %68 = vmatpush.xpose.msra.mxu0 %v67
  %v69 = vand.u32 %v47, 4294901760
  %70 = vmatpush.xpose.msra.mxu0 %v69
  %v71 = vand.u32 %v46, 4294901760
  %72 = vmatpush.xpose.msra.mxu0 %v71
  %v73 = vand.u32 %v45, 4294901760
  %74 = vmatpush.xpose.msra.mxu0 %v73
  %v75 = vand.u32 %v44, 4294901760
  %76 = vmatpush.xpose.msra.mxu0 %v75
  %v77 = vand.u32 %v43, 4294901760
  %78 = vmatpush.xpose.msra.mxu0 %v77
  %v79 = vand.u32 %v42, 4294901760
  %80 = vmatpush.xpose.msra.mxu0 %v79
  %v81 = vand.u32 %v41, 4294901760
  %82 = vmatpush.xpose.msra.mxu0 %v81
  %v83 = vand.u32 %v40, 4294901760
  %84 = vmatpush.xpose.msra.mxu0 %v83
  %v85 = vand.u32 %v39, 4294901760
  %86 = vmatpush.xpose.msra.mxu0 %v85
  %v87 = vand.u32 %v37, 4294901760
  %v88 = vsub.f32 %v37, %v87
  %v89 = vand.u32 %v88, 4294901760
  %v90 = vsub.f32 %v88, %v89
  %v91 = vand.u32 %v90, 4294901760
  %92 = vmatmul.f32.gmra.mxu0 %v91
  %v93 = vpop.f32.mrf.mxu0
  %v94 = vadd.f32 0.0, %v93
  %v95 = vand.u32 %v38, 4294901760
  %v96 = vsub.f32 %v38, %v95
  %v97 = vand.u32 %v96, 4294901760
  %v98 = vsub.f32 %v96, %v97
  %v99 = vand.u32 %v98, 4294901760
  %100 = vmatmul.f32.gmra.mxu0 %v99
  %v101 = vpop.f32.mrf.mxu0
  %v102 = vadd.f32 0.0, %v101
  %103 = vdwg.mxu0
  %v104 = vand.u32 %v54, 4294901760
  %v105 = vsub.f32 %v54, %v104
  %v106 = vand.u32 %v105, 4294901760
  %v107 = vsub.f32 %v105, %v106
  %v108 = vand.u32 %v107, 4294901760
  %109 = vmatpush.xpose.msra.mxu0 %v108
  %v110 = vand.u32 %v53, 4294901760
  %v111 = vsub.f32 %v53, %v110
  %v112 = vand.u32 %v111, 4294901760
  %v113 = vsub.f32 %v111, %v112
  %v114 = vand.u32 %v113, 4294901760
  %115 = vmatpush.xpose.msra.mxu0 %v114
  %v116 = vand.u32 %v52, 4294901760
  %v117 = vsub.f32 %v52, %v116
  %v118 = vand.u32 %v117, 4294901760
  %v119 = vsub.f32 %v117, %v118
  %v120 = vand.u32 %v119, 4294901760
  %121 = vmatpush.xpose.msra.mxu0 %v120
  %v122 = vand.u32 %v51, 4294901760
  %v123 = vsub.f32 %v51, %v122
  %v124 = vand.u32 %v123, 4294901760
  %v125 = vsub.f32 %v123, %v124
  %v126 = vand.u32 %v125, 4294901760
  %127 = vmatpush.xpose.msra.mxu0 %v126
  %v128 = vand.u32 %v50, 4294901760
  %v129 = vsub.f32 %v50, %v128
  %v130 = vand.u32 %v129, 4294901760
  %v131 = vsub.f32 %v129, %v130
  %v132 = vand.u32 %v131, 4294901760
  %133 = vmatpush.xpose.msra.mxu0 %v132
  %v134 = vand.u32 %v49, 4294901760
  %v135 = vsub.f32 %v49, %v134
  %v136 = vand.u32 %v135, 4294901760
  %v137 = vsub.f32 %v135, %v136
  %v138 = vand.u32 %v137, 4294901760
  %139 = vmatpush.xpose.msra.mxu0 %v138
  %v140 = vand.u32 %v48, 4294901760
  %v141 = vsub.f32 %v48, %v140
  %v142 = vand.u32 %v141, 4294901760
  %v143 = vsub.f32 %v141, %v142
  %v144 = vand.u32 %v143, 4294901760
  %145 = vmatpush.xpose.msra.mxu0 %v144
  %v146 = vand.u32 %v47, 4294901760
  %v147 = vsub.f32 %v47, %v146
  %v148 = vand.u32 %v147, 4294901760
  %v149 = vsub.f32 %v147, %v148
  %v150 = vand.u32 %v149, 4294901760
  %151 = vmatpush.xpose.msra.mxu0 %v150
  %v152 = vand.u32 %v46, 4294901760
  %v153 = vsub.f32 %v46, %v152
  %v154 = vand.u32 %v153, 4294901760
  %v155 = vsub.f32 %v153, %v154
  %v156 = vand.u32 %v155, 4294901760
  %157 = vmatpush.xpose.msra.mxu0 %v156
  %v158 = vand.u32 %v45, 4294901760
  %v159 = vsub.f32 %v45, %v158
  %v160 = vand.u32 %v159, 4294901760
  %v161 = vsub.f32 %v159, %v160
  %v162 = vand.u32 %v161, 4294901760
  %163 = vmatpush.xpose.msra.mxu0 %v162
  %v164 = vand.u32 %v44, 4294901760
  %v165 = vsub.f32 %v44, %v164
  %v166 = vand.u32 %v165, 4294901760
  %v167 = vsub.f32 %v165, %v166
  %v168 = vand.u32 %v167, 4294901760
  %169 = vmatpush.xpose.msra.mxu0 %v168
  %v170 = vand.u32 %v43, 4294901760
  %v171 = vsub.f32 %v43, %v170
  %v172 = vand.u32 %v171, 4294901760
  %v173 = vsub.f32 %v171, %v172
  %v174 = vand.u32 %v173, 4294901760
  %175 = vmatpush.xpose.msra.mxu0 %v174
  %v176 = vand.u32 %v42, 4294901760
  %v177 = vsub.f32 %v42, %v176
  %v178 = vand.u32 %v177, 4294901760
  %v179 = vsub.f32 %v177, %v178
  %v180 = vand.u32 %v179, 4294901760
  %181 = vmatpush.xpose.msra.mxu0 %v180
  %v182 = vand.u32 %v41, 4294901760
  %v183 = vsub.f32 %v41, %v182
  %v184 = vand.u32 %v183, 4294901760
  %v185 = vsub.f32 %v183, %v184
  %v186 = vand.u32 %v185, 4294901760
  %187 = vmatpush.xpose.msra.mxu0 %v186
  %v188 = vand.u32 %v40, 4294901760
  %v189 = vsub.f32 %v40, %v188
  %v190 = vand.u32 %v189, 4294901760
  %v191 = vsub.f32 %v189, %v190
  %v192 = vand.u32 %v191, 4294901760
  %193 = vmatpush.xpose.msra.mxu0 %v192
  %v194 = vand.u32 %v39, 4294901760
  %v195 = vsub.f32 %v39, %v194
  %v196 = vand.u32 %v195, 4294901760
  %v197 = vsub.f32 %v195, %v196
  %v198 = vand.u32 %v197, 4294901760
  %199 = vmatpush.xpose.msra.mxu0 %v198
  %v200 = vand.u32 %v37, 4294901760
  %201 = vmatmul.f32.gmra.mxu0 %v200
  %v202 = vpop.f32.mrf.mxu0
  %v203 = vadd.f32 %v94, %v202
  %v204 = vand.u32 %v38, 4294901760
  %205 = vmatmul.f32.gmra.mxu0 %v204
  %v206 = vpop.f32.mrf.mxu0
  %v207 = vadd.f32 %v102, %v206
  %208 = vdwg.mxu0
  %v209 = vand.u32 %v54, 4294901760
  %v210 = vsub.f32 %v54, %v209
  %211 = vmatpush.xpose.msra.mxu0 %v210
  %v212 = vand.u32 %v53, 4294901760
  %v213 = vsub.f32 %v53, %v212
  %214 = vmatpush.xpose.msra.mxu0 %v213
  %v215 = vand.u32 %v52, 4294901760
  %v216 = vsub.f32 %v52, %v215
  %217 = vmatpush.xpose.msra.mxu0 %v216
  %v218 = vand.u32 %v51, 4294901760
  %v219 = vsub.f32 %v51, %v218
  %220 = vmatpush.xpose.msra.mxu0 %v219
  %v221 = vand.u32 %v50, 4294901760
  %v222 = vsub.f32 %v50, %v221
  %223 = vmatpush.xpose.msra.mxu0 %v222
  %v224 = vand.u32 %v49, 4294901760
  %v225 = vsub.f32 %v49, %v224
  %226 = vmatpush.xpose.msra.mxu0 %v225
  %v227 = vand.u32 %v48, 4294901760
  %v228 = vsub.f32 %v48, %v227
  %229 = vmatpush.xpose.msra.mxu0 %v228
  %v230 = vand.u32 %v47, 4294901760
  %v231 = vsub.f32 %v47, %v230
  %232 = vmatpush.xpose.msra.mxu0 %v231
  %v233 = vand.u32 %v46, 4294901760
  %v234 = vsub.f32 %v46, %v233
  %235 = vmatpush.xpose.msra.mxu0 %v234
  %v236 = vand.u32 %v45, 4294901760
  %v237 = vsub.f32 %v45, %v236
  %238 = vmatpush.xpose.msra.mxu0 %v237
  %v239 = vand.u32 %v44, 4294901760
  %v240 = vsub.f32 %v44, %v239
  %241 = vmatpush.xpose.msra.mxu0 %v240
  %v242 = vand.u32 %v43, 4294901760
  %v243 = vsub.f32 %v43, %v242
  %244 = vmatpush.xpose.msra.mxu0 %v243
  %v245 = vand.u32 %v42, 4294901760
  %v246 = vsub.f32 %v42, %v245
  %247 = vmatpush.xpose.msra.mxu0 %v246
  %v248 = vand.u32 %v41, 4294901760
  %v249 = vsub.f32 %v41, %v248
  %250 = vmatpush.xpose.msra.mxu0 %v249
  %v251 = vand.u32 %v40, 4294901760
  %v252 = vsub.f32 %v40, %v251
  %253 = vmatpush.xpose.msra.mxu0 %v252
  %v254 = vand.u32 %v39, 4294901760
  %v255 = vsub.f32 %v39, %v254
  %256 = vmatpush.xpose.msra.mxu0 %v255
  %v257 = vand.u32 %v37, 4294901760
  %v258 = vsub.f32 %v37, %v257
  %259 = vmatmul.f32.gmra.mxu0 %v258
  %v260 = vpop.f32.mrf.mxu0
  %v261 = vadd.f32 %v203, %v260
  %v262 = vand.u32 %v38, 4294901760
  %v263 = vsub.f32 %v38, %v262
  %264 = vmatmul.f32.gmra.mxu0 %v263
  %v265 = vpop.f32.mrf.mxu0
  %v266 = vadd.f32 %v207, %v265
  %267 = vdwg.mxu0
  %v268 = vand.u32 %v54, 4294901760
  %269 = vmatpush.xpose.msra.mxu0 %v268
  %v270 = vand.u32 %v53, 4294901760
  %271 = vmatpush.xpose.msra.mxu0 %v270
  %v272 = vand.u32 %v52, 4294901760
  %273 = vmatpush.xpose.msra.mxu0 %v272
  %v274 = vand.u32 %v51, 4294901760
  %275 = vmatpush.xpose.msra.mxu0 %v274
  %v276 = vand.u32 %v50, 4294901760
  %277 = vmatpush.xpose.msra.mxu0 %v276
  %v278 = vand.u32 %v49, 4294901760
  %279 = vmatpush.xpose.msra.mxu0 %v278
  %v280 = vand.u32 %v48, 4294901760
  %281 = vmatpush.xpose.msra.mxu0 %v280
  %v282 = vand.u32 %v47, 4294901760
  %283 = vmatpush.xpose.msra.mxu0 %v282
  %v284 = vand.u32 %v46, 4294901760
  %285 = vmatpush.xpose.msra.mxu0 %v284
  %v286 = vand.u32 %v45, 4294901760
  %287 = vmatpush.xpose.msra.mxu0 %v286
  %v288 = vand.u32 %v44, 4294901760
  %289 = vmatpush.xpose.msra.mxu0 %v288
  %v290 = vand.u32 %v43, 4294901760
  %291 = vmatpush.xpose.msra.mxu0 %v290
  %v292 = vand.u32 %v42, 4294901760
  %293 = vmatpush.xpose.msra.mxu0 %v292
  %v294 = vand.u32 %v41, 4294901760
  %295 = vmatpush.xpose.msra.mxu0 %v294
  %v296 = vand.u32 %v40, 4294901760
  %297 = vmatpush.xpose.msra.mxu0 %v296
  %v298 = vand.u32 %v39, 4294901760
  %299 = vmatpush.xpose.msra.mxu0 %v298
  %v300 = vand.u32 %v37, 4294901760
  %v301 = vsub.f32 %v37, %v300
  %v302 = vand.u32 %v301, 4294901760
  %303 = vmatmul.f32.gmra.mxu0 %v302
  %v304 = vpop.f32.mrf.mxu0
  %v305 = vadd.f32 %v261, %v304
  %v306 = vand.u32 %v38, 4294901760
  %v307 = vsub.f32 %v38, %v306
  %v308 = vand.u32 %v307, 4294901760
  %309 = vmatmul.f32.gmra.mxu0 %v308
  %v310 = vpop.f32.mrf.mxu0
  %v311 = vadd.f32 %v266, %v310
  %312 = vdwg.mxu0
  %v313 = vand.u32 %v54, 4294901760
  %v314 = vsub.f32 %v54, %v313
  %v315 = vand.u32 %v314, 4294901760
  %316 = vmatpush.xpose.msra.mxu0 %v315
  %v317 = vand.u32 %v53, 4294901760
  %v318 = vsub.f32 %v53, %v317
  %v319 = vand.u32 %v318, 4294901760
  %320 = vmatpush.xpose.msra.mxu0 %v319
  %v321 = vand.u32 %v52, 4294901760
  %v322 = vsub.f32 %v52, %v321
  %v323 = vand.u32 %v322, 4294901760
  %324 = vmatpush.xpose.msra.mxu0 %v323
  %v325 = vand.u32 %v51, 4294901760
  %v326 = vsub.f32 %v51, %v325
  %v327 = vand.u32 %v326, 4294901760
  %328 = vmatpush.xpose.msra.mxu0 %v327
  %v329 = vand.u32 %v50, 4294901760
  %v330 = vsub.f32 %v50, %v329
  %v331 = vand.u32 %v330, 4294901760
  %332 = vmatpush.xpose.msra.mxu0 %v331
  %v333 = vand.u32 %v49, 4294901760
  %v334 = vsub.f32 %v49, %v333
  %v335 = vand.u32 %v334, 4294901760
  %336 = vmatpush.xpose.msra.mxu0 %v335
  %v337 = vand.u32 %v48, 4294901760
  %v338 = vsub.f32 %v48, %v337
  %v339 = vand.u32 %v338, 4294901760
  %340 = vmatpush.xpose.msra.mxu0 %v339
  %v341 = vand.u32 %v47, 4294901760
  %v342 = vsub.f32 %v47, %v341
  %v343 = vand.u32 %v342, 4294901760
  %344 = vmatpush.xpose.msra.mxu0 %v343
  %v345 = vand.u32 %v46, 4294901760
  %v346 = vsub.f32 %v46, %v345
  %v347 = vand.u32 %v346, 4294901760
  %348 = vmatpush.xpose.msra.mxu0 %v347
  %v349 = vand.u32 %v45, 4294901760
  %v350 = vsub.f32 %v45, %v349
  %v351 = vand.u32 %v350, 4294901760
  %352 = vmatpush.xpose.msra.mxu0 %v351
  %v353 = vand.u32 %v44, 4294901760
  %v354 = vsub.f32 %v44, %v353
  %v355 = vand.u32 %v354, 4294901760
  %356 = vmatpush.xpose.msra.mxu0 %v355
  %v357 = vand.u32 %v43, 4294901760
  %v358 = vsub.f32 %v43, %v357
  %v359 = vand.u32 %v358, 4294901760
  %360 = vmatpush.xpose.msra.mxu0 %v359
  %v361 = vand.u32 %v42, 4294901760
  %v362 = vsub.f32 %v42, %v361
  %v363 = vand.u32 %v362, 4294901760
  %364 = vmatpush.xpose.msra.mxu0 %v363
  %v365 = vand.u32 %v41, 4294901760
  %v366 = vsub.f32 %v41, %v365
  %v367 = vand.u32 %v366, 4294901760
  %368 = vmatpush.xpose.msra.mxu0 %v367
  %v369 = vand.u32 %v40, 4294901760
  %v370 = vsub.f32 %v40, %v369
  %v371 = vand.u32 %v370, 4294901760
  %372 = vmatpush.xpose.msra.mxu0 %v371
  %v373 = vand.u32 %v39, 4294901760
  %v374 = vsub.f32 %v39, %v373
  %v375 = vand.u32 %v374, 4294901760
  %376 = vmatpush.xpose.msra.mxu0 %v375
  %v377 = vand.u32 %v37, 4294901760
  %378 = vmatmul.f32.gmra.mxu0 %v377
  %v379 = vpop.f32.mrf.mxu0
  %v380 = vadd.f32 %v305, %v379
  %v381 = vand.u32 %v38, 4294901760
  %382 = vmatmul.f32.gmra.mxu0 %v381
  %v383 = vpop.f32.mrf.mxu0
  %v384 = vadd.f32 %v311, %v383
  %385 = vdwg.mxu0
  %v386 = vand.u32 %v54, 4294901760
  %387 = vmatpush.xpose.msra.mxu0 %v386
  %v388 = vand.u32 %v53, 4294901760
  %389 = vmatpush.xpose.msra.mxu0 %v388
  %v390 = vand.u32 %v52, 4294901760
  %391 = vmatpush.xpose.msra.mxu0 %v390
  %v392 = vand.u32 %v51, 4294901760
  %393 = vmatpush.xpose.msra.mxu0 %v392
  %v394 = vand.u32 %v50, 4294901760
  %395 = vmatpush.xpose.msra.mxu0 %v394
  %v396 = vand.u32 %v49, 4294901760
  %397 = vmatpush.xpose.msra.mxu0 %v396
  %v398 = vand.u32 %v48, 4294901760
  %399 = vmatpush.xpose.msra.mxu0 %v398
  %v400 = vand.u32 %v47, 4294901760
  %401 = vmatpush.xpose.msra.mxu0 %v400
  %v402 = vand.u32 %v46, 4294901760
  %403 = vmatpush.xpose.msra.mxu0 %v402
  %v404 = vand.u32 %v45, 4294901760
  %405 = vmatpush.xpose.msra.mxu0 %v404
  %v406 = vand.u32 %v44, 4294901760
  %407 = vmatpush.xpose.msra.mxu0 %v406
  %v408 = vand.u32 %v43, 4294901760
  %409 = vmatpush.xpose.msra.mxu0 %v408
  %v410 = vand.u32 %v42, 4294901760
  %411 = vmatpush.xpose.msra.mxu0 %v410
  %v412 = vand.u32 %v41, 4294901760
  %413 = vmatpush.xpose.msra.mxu0 %v412
  %v414 = vand.u32 %v40, 4294901760
  %415 = vmatpush.xpose.msra.mxu0 %v414
  %v416 = vand.u32 %v39, 4294901760
  %417 = vmatpush.xpose.msra.mxu0 %v416
  %v418 = vand.u32 %v37, 4294901760
  %419 = vmatmul.f32.gmra.mxu0 %v418
  %v420 = vpop.f32.mrf.mxu0
  %v421 = vadd.f32 %v380, %v420
  %v422 = vand.u32 %v38, 4294901760
  %423 = vmatmul.f32.gmra.mxu0 %v422
  %v424 = vpop.f32.mrf.mxu0
  %v425 = vadd.f32 %v384, %v424
  %426 = vdwg.mxu0
  %427 = vst [vmem:[%s3] sm:$0xff] %v421
  %428 = vst [vmem:[%s3 + $0x8] sm:$0xff] %v425
  // Predicated region
  $region14: #{spd_rectified.1} parent=0 // pred_check
    _
  $region15: #{spd_rectified.1} parent=0 // pred_check_branch
    %430 = sbr.rel (0) target = $region17
  $region16: #{spd_rectified.1} parent=0 // pred_region
    _
  $region17: #{spd_rectified.1} parent=0 // pred_fallthru
    _
  // Predicated region
  $region18: #{spd_rectified.1} parent=0 // pred_check
    _
  $region19: #{spd_rectified.1} parent=0 // pred_check_branch
    %432 = sbr.rel (0) target = $region21
  $region20: #{spd_rectified.1} parent=0 // pred_region
    _
  $region21: #{spd_rectified.1} parent=0 // pred_fallthru
    _

</llo_original>
